<compile_context>
chip_gen: v5e
topology: v5e:2x2
jax: 0.10.0
libtpu: 0.0.40
codegen_flags: <defaults>
</compile_context>

<pallas_src>
import functools

import jax
import jax.numpy as jnp
from jax.experimental import pallas as pl
from jax.experimental.pallas import tpu as pltpu


def _round_up(x, m):
    return ((x + m - 1) // m) * m


def _attention_kernel(enc_ref, att2_ref, we_ref, be_ref, wf_ref, bf_ref,
                      awe_ref, alpha_ref, *, p_valid, approx_recip):
    """One grid step == NB (sublane-aligned) batch elements.

    enc_ref   : (NB, Pp, E)   encoder_out slab (pixels padded to a multiple of 8)
    att2_ref  : (NB, A)       decoder projection, precomputed in the wrapper
    we_ref    : (E, A)        encoder_att weight (transposed), VMEM-resident
    be_ref    : (1, A)        encoder_att bias
    wf_ref    : (1, A)        full_att weight as a row vector
    bf_ref    : (1, 1)        full_att bias (SMEM scalar; softmax is shift-invariant)
    awe_ref   : (NB, E_out)   attention-weighted encoding (lane-padded output)
    alpha_ref : (NB, P_out)   attention weights (lane-padded, lane-dense output)
    """
    NB, Pp, E = enc_ref.shape
    A = we_ref.shape[1]
    E_out = awe_ref.shape[-1]
    P_out = alpha_ref.shape[-1]

    # att1 = encoder_att(encoder_out): one (NB*Pp, E) @ (E, A) MXU matmul.
    enc2d = enc_ref[...].reshape(NB * Pp, E)          # free relayout (Pp % 8 == 0)
    att1 = (jnp.dot(enc2d, we_ref[...], preferred_element_type=jnp.float32)
            + be_ref[...])                            # (NB*Pp, A)

    # relu(att1 + att2.unsqueeze(1)); att2 was hoisted out of the grid.
    att = jnp.maximum(
        att1.reshape(NB, Pp, A) + att2_ref[...][:, None, :].astype(jnp.float32),
        0.0)                                          # (NB, Pp, A)

    # full_att(att).squeeze(2): VPU multiply + cross-lane reduce (skip the N=1 MXU pass).
    score = jnp.sum(att * wf_ref[...], axis=-1) + bf_ref[0, 0]        # (NB, Pp)

    # Mask padded pixels (generated only when Pp > p_valid).
    if p_valid < Pp:
        lane = jax.lax.broadcasted_iota(jnp.int32, (NB, Pp), 1)
        score = jnp.where(lane < p_valid, score, -jnp.inf)

    # Softmax over pixels (lane axis -> single cross-lane XLU reduce per row).
    m = jnp.max(score, axis=-1, keepdims=True)
    e = jnp.exp(score - m)
    denom = jnp.sum(e, axis=-1, keepdims=True)
    alpha = e * pl.reciprocal(denom, approx=approx_recip)             # (NB, Pp)

    # attention_weighted_encoding: batched MXU contraction over pixels.
    # Re-reads enc_ref at the point of use -> no long-lived f32 enc value / spills.
    awe = jnp.einsum("bqp,bpe->bqe",
                     alpha[:, None, :],
                     enc_ref[...].astype(jnp.float32),
                     preferred_element_type=jnp.float32)[:, 0, :]     # (NB, E)

    # Lane-pad to multiples of 128 so both outputs take unmasked full-width stores.
    if E_out > E:
        awe = jnp.concatenate(
            [awe, jnp.zeros((NB, E_out - E), dtype=awe.dtype)], axis=-1)
    if P_out > Pp:
        alpha = jnp.concatenate(
            [alpha, jnp.zeros((NB, P_out - Pp), dtype=alpha.dtype)], axis=-1)

    awe_ref[...] = awe.astype(awe_ref.dtype)
    alpha_ref[...] = alpha.astype(alpha_ref.dtype)


def _vmem_capacity_bytes():
    try:
        return int(pltpu.get_tpu_info().vmem_capacity_bytes)
    except Exception:
        return 64 * 1024 * 1024      # conservative: v7x per-TensorCore VMEM


def _step_vmem_bytes(nb, p_pad, enc_dim, att_dim, e_out, p_out):
    # enc slab, att2 and both outputs are double-buffered by the pipeline;
    # we/be/wf weights are single-buffered (constant index_map + Buffered(1)).
    weight_bytes = (enc_dim * att_dim + 2 * att_dim) * 4
    return 2 * nb * (p_pad * enc_dim + att_dim + e_out + p_out) * 4 + weight_bytes


def _pick_block_batch(bs_pad, p_pad, enc_dim, att_dim, e_out, p_out, vmem_cap):
    """Largest sublane-aligned batch block that fits ~half the VMEM budget,
    keeps >=2 grid steps when the batch allows (v7x has 2 TensorCores), and
    prefers NB*Pp that is a multiple of 128 (full MXU M tiles on v5e)."""
    budget = vmem_cap // 2
    max_nb = bs_pad if bs_pad < 16 else bs_pad // 2
    fits = [nb for nb in range(8, max_nb + 1, 8)
            if bs_pad % nb == 0
            and _step_vmem_bytes(nb, p_pad, enc_dim, att_dim, e_out, p_out) <= budget]
    if not fits:
        return 8
    aligned = [nb for nb in fits if (nb * p_pad) % 128 == 0]
    return max(aligned) if aligned else max(fits)


def attention_module(encoder_out, decoder_hidden, params, block_batch=None,
                     approx_recip=False):
    """Pallas forward of AttentionModule. Returns (attention_weighted_encoding, alpha)."""
    bs, P, E = encoder_out.shape
    A = params["we"].shape[1]
    dt = encoder_out.dtype

    # Hoist the decoder projection out of the grid (one XLA matmul per call).
    att2 = (decoder_hidden @ params["wd"] + params["bd"]).astype(jnp.float32)  # (bs, A)

    # Pad pixels to a sublane multiple (free in-kernel reshape, aligned alpha rows)
    # and batch to a sublane multiple (NB is never 1/2 -> dense sublane stores).
    Pp = _round_up(P, 8)
    bs_pad = _round_up(bs, 8)
    enc = encoder_out
    if Pp != P:
        enc = jnp.pad(enc, ((0, 0), (0, Pp - P), (0, 0)))
    if bs_pad != bs:
        enc = jnp.pad(enc, ((0, bs_pad - bs), (0, 0), (0, 0)))
        att2 = jnp.pad(att2, ((0, bs_pad - bs), (0, 0)))

    # Lane-padded output widths -> unmasked vst on every generation.
    E_out = _round_up(E, 128)
    P_out = _round_up(Pp, 128)

    vmem_cap = _vmem_capacity_bytes()
    if block_batch is not None:
        NB = block_batch
        assert bs_pad % NB == 0, "block batch must divide the (padded) batch size"
    else:
        NB = _pick_block_batch(bs_pad, Pp, E, A, E_out, P_out, vmem_cap)

    per_step = _step_vmem_bytes(NB, Pp, E, A, E_out, P_out)
    vmem_limit = int(min(max(2 * per_step, 32 * 1024 * 1024), (3 * vmem_cap) // 4))

    we = params["we"]                         # (E, A)
    be = params["be"].reshape(1, A)
    wf = params["wf"].reshape(1, A)           # (A, 1) -> row vector
    bf = params["bf"].reshape(1, 1)           # scalar, lives in SMEM

    kernel = functools.partial(_attention_kernel, p_valid=P,
                               approx_recip=approx_recip)

    def run(single_buffer_weights):
        wkw = {"pipeline_mode": pl.Buffered(1)} if single_buffer_weights else {}
        return pl.pallas_call(
            kernel,
            out_shape=(
                jax.ShapeDtypeStruct((bs_pad, E_out), dt),
                jax.ShapeDtypeStruct((bs_pad, P_out), dt),
            ),
            grid_spec=pltpu.PrefetchScalarGridSpec(
                num_scalar_prefetch=0,
                grid=(bs_pad // NB,),
                in_specs=[
                    pl.BlockSpec((NB, Pp, E), lambda b: (b, 0, 0)),      # encoder_out slab
                    pl.BlockSpec((NB, A), lambda b: (b, 0)),             # precomputed att2
                    pl.BlockSpec((E, A), lambda b: (0, 0), **wkw),       # we (resident)
                    pl.BlockSpec((1, A), lambda b: (0, 0), **wkw),       # be
                    pl.BlockSpec((1, A), lambda b: (0, 0), **wkw),       # wf row
                    pl.BlockSpec(memory_space=pltpu.MemorySpace.SMEM),   # bf scalar
                ],
                out_specs=[
                    pl.BlockSpec((NB, E_out), lambda b: (b, 0)),         # awe  (lane-dense)
                    pl.BlockSpec((NB, P_out), lambda b: (b, 0)),         # alpha (lane-dense)
                ],
            ),
            compiler_params=pltpu.CompilerParams(
                dimension_semantics=("parallel",),
                vmem_limit_bytes=vmem_limit,
            ),
        )(enc, att2, we, be, wf, bf)

    try:
        awe_pad, alpha_pad = run(True)
    except Exception:
        # pl.Buffered(1) weight residency unsupported on this jax/Mosaic build;
        # fall back to default double-buffered weights (identical semantics).
        awe_pad, alpha_pad = run(False)

    # TODO(synk): optional bf16 encoder/weight path (~2x at the HBM roofline) is
    # omitted to preserve 1e-5 parity with the f32 PyTorch reference.
    awe = awe_pad[:bs, :E]
    alpha = alpha_pad[:bs, :P]
    return awe, alpha


def _reference(encoder_out, decoder_hidden, params):
    """Pure-JAX reference mirroring the PyTorch forward."""
    att1 = encoder_out @ params["we"] + params["be"]          # (bs, P, A)
    att2 = decoder_hidden @ params["wd"] + params["bd"]       # (bs, A)
    att = jax.nn.relu(att1 + att2[:, None, :])
    score = (att @ params["wf"])[..., 0] + params["bf"][0]    # (bs, P)
    alpha = jax.nn.softmax(score, axis=1)
    awe = jnp.sum(encoder_out * alpha[:, :, None], axis=1)
    return awe, alpha


if __name__ == "__main__":
    bs, P, E, D, A = 2, 16, 32, 32, 32

    key = jax.random.PRNGKey(0)
    k_enc, k_dec, k_we, k_be, k_wd, k_bd, k_wf, k_bf = jax.random.split(key, 8)

    encoder_out = jax.random.normal(k_enc, (bs, P, E), dtype=jnp.float32)
    decoder_hidden = jax.random.normal(k_dec, (bs, D), dtype=jnp.float32)

    # Deterministic parameter init (weights stored as (in_dim, out_dim)).
    params = {
        "we": jax.random.normal(k_we, (E, A), dtype=jnp.float32) * 0.1,
        "be": jax.random.normal(k_be, (A,), dtype=jnp.float32) * 0.1,
        "wd": jax.random.normal(k_wd, (D, A), dtype=jnp.float32) * 0.1,
        "bd": jax.random.normal(k_bd, (A,), dtype=jnp.float32) * 0.1,
        "wf": jax.random.normal(k_wf, (A, 1), dtype=jnp.float32) * 0.1,
        "bf": jax.random.normal(k_bf, (1,), dtype=jnp.float32) * 0.1,
    }

    awe, alpha = attention_module(encoder_out, decoder_hidden, params)
    awe = jax.block_until_ready(awe)
    alpha = jax.block_until_ready(alpha)

    awe_ref, alpha_ref = _reference(encoder_out, decoder_hidden, params)
    assert awe.shape == (bs, E) and alpha.shape == (bs, P)
    assert jnp.allclose(awe, awe_ref, atol=1e-5, rtol=1e-5)
    assert jnp.allclose(alpha, alpha_ref, atol=1e-5, rtol=1e-5)

    print("KERNEL_OK")
</pallas_src>

<mosaic_0001>
module attributes {stable_mosaic.version = 11 : i64} {
  func.func @_attention_kernel(%arg0: i32, %arg1: memref<8x16x32xf32, #tpu.memory_space<vmem>>, %arg2: memref<8x32xf32, #tpu.memory_space<vmem>>, %arg3: memref<32x32xf32, #tpu.memory_space<vmem>>, %arg4: memref<1x32xf32, #tpu.memory_space<vmem>>, %arg5: memref<1x32xf32, #tpu.memory_space<vmem>>, %arg6: memref<1x1xf32, #tpu.memory_space<smem>>, %arg7: memref<8x128xf32, #tpu.memory_space<vmem>>, %arg8: memref<8x128xf32, #tpu.memory_space<vmem>>) attributes {dimension_semantics = [#tpu.dimension_semantics<parallel>], iteration_bounds = array<i64: 1>, scalar_prefetch = 0 : i64, scratch_operands = 0 : i64, tpu.core_type = #tpu.core_type<tc>, window_params = [{transform_indices = @transform_0, window_bounds = array<i64: 8, 16, 32>}, {transform_indices = @transform_1, window_bounds = array<i64: 8, 32>}, {pipeline_mode = #tpu.pipeline_mode<synchronous>, transform_indices = @transform_2, window_bounds = array<i64: 32, 32>}, {pipeline_mode = #tpu.pipeline_mode<synchronous>, transform_indices = @transform_3, window_bounds = array<i64: 1, 32>}, {pipeline_mode = #tpu.pipeline_mode<synchronous>, transform_indices = @transform_4, window_bounds = array<i64: 1, 32>}, {transform_indices = @transform_5, window_bounds = array<i64: 1, 1>}, {transform_indices = @transform_6, window_bounds = array<i64: 8, 128>}, {transform_indices = @transform_7, window_bounds = array<i64: 8, 128>}]} {
    %c0 = arith.constant 0 : index
    %c0_0 = arith.constant 0 : index
    %c0_1 = arith.constant 0 : index
    %0 = vector.load %arg1[%c0, %c0_0, %c0_1] : memref<8x16x32xf32, #tpu.memory_space<vmem>>, vector<8x16x32xf32>
    %1 = vector.shape_cast %0 : vector<8x16x32xf32> to vector<128x32xf32>
    %c0_2 = arith.constant 0 : index
    %c0_3 = arith.constant 0 : index
    %2 = vector.load %arg3[%c0_2, %c0_3] : memref<32x32xf32, #tpu.memory_space<vmem>>, vector<32x32xf32>
    %cst = arith.constant dense<0.000000e+00> : vector<128x32xf32>
    %3 = tpu.matmul %1, %2, %cst {dimension_numbers = #tpu.dot_dimension_numbers<[1], [0], [0], [1], [0, 0, 1, 1], [], []>} : vector<128x32xf32>, vector<32x32xf32>, vector<128x32xf32> -> vector<128x32xf32>
    %c0_4 = arith.constant 0 : index
    %c0_5 = arith.constant 0 : index
    %4 = vector.load %arg4[%c0_4, %c0_5] : memref<1x32xf32, #tpu.memory_space<vmem>>, vector<1x32xf32>
    %5 = vector.broadcast %4 : vector<1x32xf32> to vector<128x32xf32>
    %6 = arith.addf %3, %5 : vector<128x32xf32>
    %7 = vector.shape_cast %6 : vector<128x32xf32> to vector<8x16x32xf32>
    %c0_6 = arith.constant 0 : index
    %c0_7 = arith.constant 0 : index
    %8 = vector.load %arg2[%c0_6, %c0_7] : memref<8x32xf32, #tpu.memory_space<vmem>>, vector<8x32xf32>
    %9 = vector.shape_cast %8 : vector<8x32xf32> to vector<8x1x32xf32>
    %10 = vector.broadcast %9 : vector<8x1x32xf32> to vector<8x16x32xf32>
    %11 = arith.addf %7, %10 : vector<8x16x32xf32>
    %cst_8 = arith.constant 0.000000e+00 : f32
    %12 = vector.broadcast %cst_8 : f32 to vector<8x16x32xf32>
    %13 = arith.maximumf %11, %12 : vector<8x16x32xf32>
    %c0_9 = arith.constant 0 : index
    %c0_10 = arith.constant 0 : index
    %14 = vector.load %arg5[%c0_9, %c0_10] : memref<1x32xf32, #tpu.memory_space<vmem>>, vector<1x32xf32>
    %15 = vector.shape_cast %14 : vector<1x32xf32> to vector<1x1x32xf32>
    %16 = vector.broadcast %15 : vector<1x1x32xf32> to vector<8x16x32xf32>
    %17 = arith.mulf %13, %16 : vector<8x16x32xf32>
    %cst_11 = arith.constant dense<0.000000e+00> : vector<8x16xf32>
    %18 = vector.multi_reduction <add>, %17, %cst_11 [2] : vector<8x16x32xf32> to vector<8x16xf32>
    %c0_12 = arith.constant 0 : index
    %c0_13 = arith.constant 0 : index
    %19 = memref.load %arg6[%c0_12, %c0_13] : memref<1x1xf32, #tpu.memory_space<smem>>
    %20 = vector.broadcast %19 : f32 to vector<8x16xf32>
    %21 = arith.addf %18, %20 : vector<8x16xf32>
    %cst_14 = arith.constant dense<0xFF800000> : vector<8xf32>
    %22 = vector.multi_reduction <maximumf>, %21, %cst_14 [1] : vector<8x16xf32> to vector<8xf32>
    %23 = vector.shape_cast %22 : vector<8xf32> to vector<8x1xf32>
    %24 = vector.broadcast %23 : vector<8x1xf32> to vector<8x16xf32>
    %25 = arith.subf %21, %24 : vector<8x16xf32>
    %26 = math.exp %25 : vector<8x16xf32>
    %cst_15 = arith.constant dense<0.000000e+00> : vector<8xf32>
    %27 = vector.multi_reduction <add>, %26, %cst_15 [1] : vector<8x16xf32> to vector<8xf32>
    %28 = vector.shape_cast %27 : vector<8xf32> to vector<8x1xf32>
    %29 = tpu.reciprocal %28 : vector<8x1xf32> -> vector<8x1xf32>
    %30 = vector.broadcast %29 : vector<8x1xf32> to vector<8x16xf32>
    %31 = arith.mulf %26, %30 : vector<8x16xf32>
    %32 = vector.shape_cast %31 : vector<8x16xf32> to vector<8x1x16xf32>
    %c0_16 = arith.constant 0 : index
    %c0_17 = arith.constant 0 : index
    %c0_18 = arith.constant 0 : index
    %33 = vector.load %arg1[%c0_16, %c0_17, %c0_18] : memref<8x16x32xf32, #tpu.memory_space<vmem>>, vector<8x16x32xf32>
    "tpu.trace_start"() <{level = 10 : i32, message = "bqp,bpe->bqe"}> : () -> ()
    %cst_19 = arith.constant dense<0.000000e+00> : vector<8x1x32xf32>
    %34 = tpu.matmul %32, %33, %cst_19 {dimension_numbers = #tpu.dot_dimension_numbers<[2], [1], [1], [2], [0, 0, 0, 1, 1, 2], [0], [0]>} : vector<8x1x16xf32>, vector<8x16x32xf32>, vector<8x1x32xf32> -> vector<8x1x32xf32>
    "tpu.trace_stop"() : () -> ()
    %35 = vector.shape_cast %34 : vector<8x1x32xf32> to vector<8x32xf32>
    %cst_20 = arith.constant 0.000000e+00 : f32
    %36 = vector.broadcast %cst_20 : f32 to vector<8x96xf32>
    %37 = tpu.concatenate %35, %36 in 1 : vector<8x32xf32>, vector<8x96xf32> -> vector<8x128xf32>
    %cst_21 = arith.constant 0.000000e+00 : f32
    %38 = vector.broadcast %cst_21 : f32 to vector<8x112xf32>
    %39 = tpu.concatenate %31, %38 in 1 : vector<8x16xf32>, vector<8x112xf32> -> vector<8x128xf32>
    %c0_22 = arith.constant 0 : index
    %c0_23 = arith.constant 0 : index
    %40 = vector.load %arg7[%c0_22, %c0_23] : memref<8x128xf32, #tpu.memory_space<vmem>>, vector<8x128xf32>
    tpu.vector_store %arg7[%c0_22, %c0_23], %37 {strides = array<i32>} : memref<8x128xf32, #tpu.memory_space<vmem>>, vector<8x128xf32>,
    %c0_24 = arith.constant 0 : index
    %c0_25 = arith.constant 0 : index
    %41 = vector.load %arg8[%c0_24, %c0_25] : memref<8x128xf32, #tpu.memory_space<vmem>>, vector<8x128xf32>
    tpu.vector_store %arg8[%c0_24, %c0_25], %39 {strides = array<i32>} : memref<8x128xf32, #tpu.memory_space<vmem>>, vector<8x128xf32>,
    return
  }
  func.func @transform_0(%arg0: i32) -> (i32, i32, i32) {
    %c0_i32 = arith.constant 0 : i32
    %c0_i32_0 = arith.constant 0 : i32
    %c0_i32_1 = arith.constant 0 : i32
    return %arg0, %c0_i32, %c0_i32_0 : i32, i32, i32
  }
  func.func @transform_1(%arg0: i32) -> (i32, i32) {
    %c0_i32 = arith.constant 0 : i32
    %c0_i32_0 = arith.constant 0 : i32
    return %arg0, %c0_i32 : i32, i32
  }
  func.func @transform_2(%arg0: i32) -> (i32, i32) {
    %c0_i32 = arith.constant 0 : i32
    %c0_i32_0 = arith.constant 0 : i32
    %c0_i32_1 = arith.constant 0 : i32
    return %c0_i32, %c0_i32_0 : i32, i32
  }
  func.func @transform_3(%arg0: i32) -> (i32, i32) {
    %c0_i32 = arith.constant 0 : i32
    %c0_i32_0 = arith.constant 0 : i32
    %c0_i32_1 = arith.constant 0 : i32
    return %c0_i32, %c0_i32_0 : i32, i32
  }
  func.func @transform_4(%arg0: i32) -> (i32, i32) {
    %c0_i32 = arith.constant 0 : i32
    %c0_i32_0 = arith.constant 0 : i32
    %c0_i32_1 = arith.constant 0 : i32
    return %c0_i32, %c0_i32_0 : i32, i32
  }
  func.func @transform_5(%arg0: i32) -> (i32, i32) {
    %c0_i32 = arith.constant 0 : i32
    %c0_i32_0 = arith.constant 0 : i32
    %c0_i32_1 = arith.constant 0 : i32
    return %c0_i32, %c0_i32_0 : i32, i32
  }
  func.func @transform_6(%arg0: i32) -> (i32, i32) {
    %c0_i32 = arith.constant 0 : i32
    %c0_i32_0 = arith.constant 0 : i32
    return %arg0, %c0_i32 : i32, i32
  }
  func.func @transform_7(%arg0: i32) -> (i32, i32) {
    %c0_i32 = arith.constant 0 : i32
    %c0_i32_0 = arith.constant 0 : i32
    return %arg0, %c0_i32 : i32, i32
  }
}

module attributes {stable_mosaic.version = 11 : i64} {
  func.func @_attention_kernel(%arg0: i32, %arg1: memref<8x16x32xf32, #tpu.memory_space<vmem>>, %arg2: memref<8x32xf32, #tpu.memory_space<vmem>>, %arg3: memref<32x32xf32, #tpu.memory_space<vmem>>, %arg4: memref<1x32xf32, #tpu.memory_space<vmem>>, %arg5: memref<1x32xf32, #tpu.memory_space<vmem>>, %arg6: memref<1x1xf32, #tpu.memory_space<smem>>, %arg7: memref<8x128xf32, #tpu.memory_space<vmem>>, %arg8: memref<8x128xf32, #tpu.memory_space<vmem>>) attributes {dimension_semantics = [#tpu.dimension_semantics<parallel>], iteration_bounds = array<i64: 1>, scalar_prefetch = 0 : i64, scratch_operands = 0 : i64, tpu.core_type = #tpu.core_type<tc>, window_params = [{transform_indices = @transform_0, window_bounds = array<i64: 8, 16, 32>}, {transform_indices = @transform_1, window_bounds = array<i64: 8, 32>}, {pipeline_mode = #tpu.pipeline_mode<synchronous>, transform_indices = @transform_2, window_bounds = array<i64: 32, 32>}, {pipeline_mode = #tpu.pipeline_mode<synchronous>, transform_indices = @transform_3, window_bounds = array<i64: 1, 32>}, {pipeline_mode = #tpu.pipeline_mode<synchronous>, transform_indices = @transform_4, window_bounds = array<i64: 1, 32>}, {transform_indices = @transform_5, window_bounds = array<i64: 1, 1>}, {transform_indices = @transform_6, window_bounds = array<i64: 8, 128>}, {transform_indices = @transform_7, window_bounds = array<i64: 8, 128>}]} {
    %c0 = arith.constant 0 : index
    %c0_0 = arith.constant 0 : index
    %c0_1 = arith.constant 0 : index
    %0 = vector.load %arg1[%c0, %c0_0, %c0_1] : memref<8x16x32xf32, #tpu.memory_space<vmem>>, vector<8x16x32xf32>
    %1 = vector.shape_cast %0 : vector<8x16x32xf32> to vector<128x32xf32>
    %c0_2 = arith.constant 0 : index
    %c0_3 = arith.constant 0 : index
    %2 = vector.load %arg3[%c0_2, %c0_3] : memref<32x32xf32, #tpu.memory_space<vmem>>, vector<32x32xf32>
    %cst = arith.constant dense<0.000000e+00> : vector<128x32xf32>
    %3 = tpu.matmul %1, %2, %cst {dimension_numbers = #tpu.dot_dimension_numbers<[1], [0], [0], [1], [0, 0, 1, 1], [], []>} : vector<128x32xf32>, vector<32x32xf32>, vector<128x32xf32> -> vector<128x32xf32>
    %c0_4 = arith.constant 0 : index
    %c0_5 = arith.constant 0 : index
    %4 = vector.load %arg4[%c0_4, %c0_5] : memref<1x32xf32, #tpu.memory_space<vmem>>, vector<1x32xf32>
    %5 = vector.broadcast %4 : vector<1x32xf32> to vector<128x32xf32>
    %6 = arith.addf %3, %5 : vector<128x32xf32>
    %7 = vector.shape_cast %6 : vector<128x32xf32> to vector<8x16x32xf32>
    %c0_6 = arith.constant 0 : index
    %c0_7 = arith.constant 0 : index
    %8 = vector.load %arg2[%c0_6, %c0_7] : memref<8x32xf32, #tpu.memory_space<vmem>>, vector<8x32xf32>
    %9 = vector.shape_cast %8 : vector<8x32xf32> to vector<8x1x32xf32>
    %10 = vector.broadcast %9 : vector<8x1x32xf32> to vector<8x16x32xf32>
    %11 = arith.addf %7, %10 : vector<8x16x32xf32>
    %cst_8 = arith.constant 0.000000e+00 : f32
    %12 = vector.broadcast %cst_8 : f32 to vector<8x16x32xf32>
    %13 = arith.maximumf %11, %12 : vector<8x16x32xf32>
    %c0_9 = arith.constant 0 : index
    %c0_10 = arith.constant 0 : index
    %14 = vector.load %arg5[%c0_9, %c0_10] : memref<1x32xf32, #tpu.memory_space<vmem>>, vector<1x32xf32>
    %15 = vector.shape_cast %14 : vector<1x32xf32> to vector<1x1x32xf32>
    %16 = vector.broadcast %15 : vector<1x1x32xf32> to vector<8x16x32xf32>
    %17 = arith.mulf %13, %16 : vector<8x16x32xf32>
    %cst_11 = arith.constant dense<0.000000e+00> : vector<8x16xf32>
    %18 = vector.multi_reduction <add>, %17, %cst_11 [2] : vector<8x16x32xf32> to vector<8x16xf32>
    %c0_12 = arith.constant 0 : index
    %c0_13 = arith.constant 0 : index
    %19 = memref.load %arg6[%c0_12, %c0_13] : memref<1x1xf32, #tpu.memory_space<smem>>
    %20 = vector.broadcast %19 : f32 to vector<8x16xf32>
    %21 = arith.addf %18, %20 : vector<8x16xf32>
    %cst_14 = arith.constant dense<0xFF800000> : vector<8xf32>
    %22 = vector.multi_reduction <maximumf>, %21, %cst_14 [1] : vector<8x16xf32> to vector<8xf32>
    %23 = vector.shape_cast %22 : vector<8xf32> to vector<8x1xf32>
    %24 = vector.broadcast %23 : vector<8x1xf32> to vector<8x16xf32>
    %25 = arith.subf %21, %24 : vector<8x16xf32>
    %26 = math.exp %25 : vector<8x16xf32>
    %cst_15 = arith.constant dense<0.000000e+00> : vector<8xf32>
    %27 = vector.multi_reduction <add>, %26, %cst_15 [1] : vector<8x16xf32> to vector<8xf32>
    %28 = vector.shape_cast %27 : vector<8xf32> to vector<8x1xf32>
    %29 = tpu.reciprocal %28 : vector<8x1xf32> -> vector<8x1xf32>
    %30 = vector.broadcast %29 : vector<8x1xf32> to vector<8x16xf32>
    %31 = arith.mulf %26, %30 : vector<8x16xf32>
    %32 = vector.shape_cast %31 : vector<8x16xf32> to vector<8x1x16xf32>
    %c0_16 = arith.constant 0 : index
    %c0_17 = arith.constant 0 : index
    %c0_18 = arith.constant 0 : index
    %33 = vector.load %arg1[%c0_16, %c0_17, %c0_18] : memref<8x16x32xf32, #tpu.memory_space<vmem>>, vector<8x16x32xf32>
    "tpu.trace_start"() <{level = 10 : i32, message = "bqp,bpe->bqe"}> : () -> ()
    %cst_19 = arith.constant dense<0.000000e+00> : vector<8x1x32xf32>
    %34 = tpu.matmul %32, %33, %cst_19 {dimension_numbers = #tpu.dot_dimension_numbers<[2], [1], [1], [2], [0, 0, 0, 1, 1, 2], [0], [0]>} : vector<8x1x16xf32>, vector<8x16x32xf32>, vector<8x1x32xf32> -> vector<8x1x32xf32>
    "tpu.trace_stop"() : () -> ()
    %35 = vector.shape_cast %34 : vector<8x1x32xf32> to vector<8x32xf32>
    %cst_20 = arith.constant 0.000000e+00 : f32
    %36 = vector.broadcast %cst_20 : f32 to vector<8x96xf32>
    %37 = tpu.concatenate %35, %36 in 1 : vector<8x32xf32>, vector<8x96xf32> -> vector<8x128xf32>
    %cst_21 = arith.constant 0.000000e+00 : f32
    %38 = vector.broadcast %cst_21 : f32 to vector<8x112xf32>
    %39 = tpu.concatenate %31, %38 in 1 : vector<8x16xf32>, vector<8x112xf32> -> vector<8x128xf32>
    %c0_22 = arith.constant 0 : index
    %c0_23 = arith.constant 0 : index
    %40 = vector.load %arg7[%c0_22, %c0_23] : memref<8x128xf32, #tpu.memory_space<vmem>>, vector<8x128xf32>
    tpu.vector_store %arg7[%c0_22, %c0_23], %37 {strides = array<i32>} : memref<8x128xf32, #tpu.memory_space<vmem>>, vector<8x128xf32>,
    %c0_24 = arith.constant 0 : index
    %c0_25 = arith.constant 0 : index
    %41 = vector.load %arg8[%c0_24, %c0_25] : memref<8x128xf32, #tpu.memory_space<vmem>>, vector<8x128xf32>
    tpu.vector_store %arg8[%c0_24, %c0_25], %39 {strides = array<i32>} : memref<8x128xf32, #tpu.memory_space<vmem>>, vector<8x128xf32>,
    return
  }
  func.func @transform_0(%arg0: i32) -> (i32, i32, i32) {
    %c0_i32 = arith.constant 0 : i32
    %c0_i32_0 = arith.constant 0 : i32
    %c0_i32_1 = arith.constant 0 : i32
    return %arg0, %c0_i32, %c0_i32_0 : i32, i32, i32
  }
  func.func @transform_1(%arg0: i32) -> (i32, i32) {
    %c0_i32 = arith.constant 0 : i32
    %c0_i32_0 = arith.constant 0 : i32
    return %arg0, %c0_i32 : i32, i32
  }
  func.func @transform_2(%arg0: i32) -> (i32, i32) {
    %c0_i32 = arith.constant 0 : i32
    %c0_i32_0 = arith.constant 0 : i32
    %c0_i32_1 = arith.constant 0 : i32
    return %c0_i32, %c0_i32_0 : i32, i32
  }
  func.func @transform_3(%arg0: i32) -> (i32, i32) {
    %c0_i32 = arith.constant 0 : i32
    %c0_i32_0 = arith.constant 0 : i32
    %c0_i32_1 = arith.constant 0 : i32
    return %c0_i32, %c0_i32_0 : i32, i32
  }
  func.func @transform_4(%arg0: i32) -> (i32, i32) {
    %c0_i32 = arith.constant 0 : i32
    %c0_i32_0 = arith.constant 0 : i32
    %c0_i32_1 = arith.constant 0 : i32
    return %c0_i32, %c0_i32_0 : i32, i32
  }
  func.func @transform_5(%arg0: i32) -> (i32, i32) {
    %c0_i32 = arith.constant 0 : i32
    %c0_i32_0 = arith.constant 0 : i32
    %c0_i32_1 = arith.constant 0 : i32
    return %c0_i32, %c0_i32_0 : i32, i32
  }
  func.func @transform_6(%arg0: i32) -> (i32, i32) {
    %c0_i32 = arith.constant 0 : i32
    %c0_i32_0 = arith.constant 0 : i32
    return %arg0, %c0_i32 : i32, i32
  }
  func.func @transform_7(%arg0: i32) -> (i32, i32) {
    %c0_i32 = arith.constant 0 : i32
    %c0_i32_0 = arith.constant 0 : i32
    return %arg0, %c0_i32 : i32, i32
  }
}

</mosaic_0001>

<llo_original>
// kernel: tpu_custom_call.1
$region0: #{tpu_custom_call.1}
  #allocation0 [shape = 'u32[]', space=smem, size = 0x4, offset = 0x4, fixed_abs, tag = 'smem constant byte address 0x4 - core index']
  #allocation1 [shape = 'u32[72,128]{1,0:T(1,128)}', space=vmem, size = 0x9000, scoped, tag = 'internal scratch']
  #allocation2 [shape = 'f32[1,1]{1,0:T(1,128)S(6)}', space=smem, size = 0x200, scoped, tag = 'scoped memory for tpu_custom_call.1']
  %s0 = inlined_call_operand.hbm [shape: f32[8,16,32], index: 0, kind: input, shape index: {}]
  %s1 = inlined_call_operand.hbm [shape: f32[8,32], index: 1, kind: input, shape index: {}]
  %s2 = inlined_call_operand.hbm [shape: f32[32,32], index: 2, kind: input, shape index: {}]
  %s3 = inlined_call_operand.vmem [shape: f32[1,32], index: 3, kind: input, shape index: {}]
  %s4 = inlined_call_operand.vmem [shape: f32[1,32], index: 4, kind: input, shape index: {}]
  %s5 = inlined_call_operand.<no memory space> [shape: f32[1,1], index: 5, kind: input, shape index: {}]
  %s6 = inlined_call_operand.hbm [shape: f32[8,128], index: 6, kind: output, shape index: {0}]
  %s7 = inlined_call_operand.hbm [shape: f32[8,128], index: 7, kind: output, shape index: {1}]
  %8 = xla_tuple %s6, %s7
  %s9 = sld [smem:[#allocation0]]
  $region54: #{tpu_custom_call.1} parent=0
    _
  %s11 = ssub.s32 1, %s9
  %s12 = scalar_select 0, %s11, %s9
  %13 = sst [smem:[#allocation2]] %s5
  $region1: #{tpu_custom_call.1} parent=0
    #allocation3 [shape = 'u8[65536]{0}', space=vmem, size = 0x10000, scoped, tag = 'input window, operand 0, single buffered']
    #allocation4 [shape = 's32[1]{0}', space=sflag, size = 0x4, scoped, tag = 'scoped memory for tpu_custom_call.1']
    #allocation5 [shape = 's32[1]{0}', space=sflag, size = 0x4, scoped, tag = 'scoped memory for tpu_custom_call.1']
    #allocation6 [shape = 'u8[4096]{0}', space=vmem, size = 0x1000, scoped, tag = 'input window, operand 1, single buffered']
    #allocation7 [shape = 's32[1]{0}', space=sflag, size = 0x4, scoped, tag = 'scoped memory for tpu_custom_call.1']
    #allocation8 [shape = 'u8[16384]{0}', space=vmem, size = 0x4000, scoped, tag = 'input window, operand 2, single buffered']
    #allocation9 [shape = 'u8[4096]{0}', space=vmem, size = 0x1000, scoped, tag = 'output window, operand 0, single buffered']
    #allocation10 [shape = 'u8[4096]{0}', space=vmem, size = 0x1000, scoped, tag = 'output window, operand 1, single buffered']
    #allocation11 [shape = 's32[1]{0}', space=sflag, size = 0x4, scoped, tag = 'scoped memory for tpu_custom_call.1']
    %14 = vsyncpa [#allocation4], 0
    %15 = vsyncpa [#allocation7], 0
    %16 = vsyncpa [#allocation5], 0
    %17 = vsyncpa [#allocation11], 0
    // Predicated region
    $region2: #{tpu_custom_call.1} parent=1 // pred_check
      _
    $region3: #{tpu_custom_call.1} parent=1 // pred_check_branch
      %19 = sbr.rel (0) target = $region5
    $region4: #{tpu_custom_call.1} parent=1 // pred_region
      %21 = vsyncadd [#allocation4], 0
      %s22 = sshll.u32 %s0, 4
      %s23 = int_to_ptr.hbm [resolvable:$true] %s22
      %s24 = sshll.u32 [#allocation3], 4
      %s25 = int_to_ptr.vmem [resolvable:$true] %s24
      %30 = dma.hbm_to_vmem [thread:$0]  %s23, 2048, %s25, [#allocation4], 128, 128, 8
    $region5: #{tpu_custom_call.1} parent=1 // pred_fallthru
      _
    // Predicated region
    $region6: #{tpu_custom_call.1} parent=1 // pred_check
      _
    $region7: #{tpu_custom_call.1} parent=1 // pred_check_branch
      %32 = sbr.rel (0) target = $region9
    $region8: #{tpu_custom_call.1} parent=1 // pred_region
      %34 = vsyncadd [#allocation7], 0
      %s36 = sshll.u32 %s1, 4
      %s37 = int_to_ptr.hbm [resolvable:$true] %s36
      %s38 = sshll.u32 [#allocation6], 4
      %s39 = int_to_ptr.vmem [resolvable:$true] %s38
      %41 = dma.hbm_to_vmem [thread:$0]  %s37, 128, %s39, [#allocation7]
    $region9: #{tpu_custom_call.1} parent=1 // pred_fallthru
      _
    // Predicated region
    $region10: #{tpu_custom_call.1} parent=1 // pred_check
      _
    $region11: #{tpu_custom_call.1} parent=1 // pred_check_branch
      %43 = sbr.rel (0) target = $region13
    $region12: #{tpu_custom_call.1} parent=1 // pred_region
      %45 = vsyncadd [#allocation7], 0
      %s46 = sshll.u32 %s2, 4
      %s47 = int_to_ptr.hbm [resolvable:$true] %s46
      %s48 = sshll.u32 [#allocation8], 4
      %s49 = int_to_ptr.vmem [resolvable:$true] %s48
      %54 = dma.hbm_to_vmem [thread:$0]  %s47, 512, %s49, [#allocation7], 128, 128, 8
    $region13: #{tpu_custom_call.1} parent=1 // pred_fallthru
      _
    // Predicated region
    $region14: #{tpu_custom_call.1} parent=1 // pred_check
      _
    $region15: #{tpu_custom_call.1} parent=1 // pred_check_branch
      %56 = sbr.rel (0) target = $region17
    $region16: #{tpu_custom_call.1} parent=1 // pred_region
      _
    $region17: #{tpu_custom_call.1} parent=1 // pred_fallthru
      _
    // Predicated region
    $region18: #{tpu_custom_call.1} parent=1 // pred_check
      _
    $region19: #{tpu_custom_call.1} parent=1 // pred_check_branch
      %58 = sbr.rel (0) target = $region21
    $region20: #{tpu_custom_call.1} parent=1 // pred_region
      _
    $region21: #{tpu_custom_call.1} parent=1 // pred_fallthru
      _
    // Predicated region
    $region22: #{tpu_custom_call.1} parent=1 // pred_check
      _
    $region23: #{tpu_custom_call.1} parent=1 // pred_check_branch
      %60 = sbr.rel (0) target = $region25
    $region24: #{tpu_custom_call.1} parent=1 // pred_region
      _
    $region25: #{tpu_custom_call.1} parent=1 // pred_fallthru
      _
    // Predicated region
    $region26: #{tpu_custom_call.1} parent=1 // pred_check
      _
    $region27: #{tpu_custom_call.1} parent=1 // pred_check_branch
      %62 = sbr.rel (0) target = $region29
    $region28: #{tpu_custom_call.1} parent=1 // pred_region
      %64 = dma.done [#allocation4], 2048
    $region29: #{tpu_custom_call.1} parent=1 // pred_fallthru
      _
    // Predicated region
    $region30: #{tpu_custom_call.1} parent=1 // pred_check
      _
    $region31: #{tpu_custom_call.1} parent=1 // pred_check_branch
      %66 = sbr.rel (0) target = $region33
    $region32: #{tpu_custom_call.1} parent=1 // pred_region
      %68 = dma.done [#allocation7], 128
    $region33: #{tpu_custom_call.1} parent=1 // pred_fallthru
      _
    // Predicated region
    $region34: #{tpu_custom_call.1} parent=1 // pred_check
      _
    $region35: #{tpu_custom_call.1} parent=1 // pred_check_branch
      %70 = sbr.rel (0) target = $region37
    $region36: #{tpu_custom_call.1} parent=1 // pred_region
      %72 = dma.done [#allocation7], 512
    $region37: #{tpu_custom_call.1} parent=1 // pred_fallthru
      _
    %v73 = vld [vmem:[#allocation3] sm:$0xff]
    %v74 = vld [vmem:[#allocation3 + $0x8] sm:$0xff]
    %v75 = vld [vmem:[#allocation3 + $0x10] sm:$0xff]
    %v76 = vld [vmem:[#allocation3 + $0x18] sm:$0xff]
    %v77 = vld [vmem:[#allocation3 + $0x20] sm:$0xff]
    %v78 = vld [vmem:[#allocation3 + $0x28] sm:$0xff]
    %v79 = vld [vmem:[#allocation3 + $0x30] sm:$0xff]
    %v80 = vld [vmem:[#allocation3 + $0x38] sm:$0xff]
    %v81 = vld [vmem:[#allocation3 + $0x40] sm:$0xff]
    %v82 = vld [vmem:[#allocation3 + $0x48] sm:$0xff]
    %v83 = vld [vmem:[#allocation3 + $0x50] sm:$0xff]
    %v84 = vld [vmem:[#allocation3 + $0x58] sm:$0xff]
    %v85 = vld [vmem:[#allocation3 + $0x60] sm:$0xff]
    %v86 = vld [vmem:[#allocation3 + $0x68] sm:$0xff]
    %v87 = vld [vmem:[#allocation3 + $0x70] sm:$0xff]
    %v88 = vld [vmem:[#allocation3 + $0x78] sm:$0xff]
    %v89 = vld [vmem:[#allocation8] sm:$0xff]
    %v90 = vld [vmem:[#allocation8 + $0x8] sm:$0xff]
    %v91 = vld [vmem:[#allocation8 + $0x10] sm:$0xff]
    %v92 = vld [vmem:[#allocation8 + $0x18] sm:$0xff]
    %v93 = vld [vmem:[%s3] sm:$0x1]
    %v95 = vperm.slane %v93, 0
    %vm97 = vcmask 261120
    %v99 = vsel %vm97, %v73, 0
    %v102 = vsel %vm97, %v74, 0
    %v105 = vsel %vm97, %v75, 0
    %v108 = vsel %vm97, %v76, 0
    %v111 = vsel %vm97, %v77, 0
    %v114 = vsel %vm97, %v78, 0
    %v117 = vsel %vm97, %v79, 0
    %v120 = vsel %vm97, %v80, 0
    %v123 = vsel %vm97, %v81, 0
    %v126 = vsel %vm97, %v82, 0
    %v129 = vsel %vm97, %v83, 0
    %v132 = vsel %vm97, %v84, 0
    %v135 = vsel %vm97, %v85, 0
    %v138 = vsel %vm97, %v86, 0
    %v141 = vsel %vm97, %v87, 0
    %v144 = vsel %vm97, %v88, 0
    %146 = vmatpush.msra.mxu0 0.0
    %147 = vmatpush.msra.mxu0 0.0
    %148 = vmatpush.msra.mxu0 0.0
    %149 = vmatpush.msra.mxu0 0.0
    %150 = vmatpush.msra.mxu0 0.0
    %151 = vmatpush.msra.mxu0 0.0
    %152 = vmatpush.msra.mxu0 0.0
    %153 = vmatpush.msra.mxu0 0.0
    %154 = vmatpush.msra.mxu0 0.0
    %155 = vmatpush.msra.mxu0 0.0
    %156 = vmatpush.msra.mxu0 0.0
    %157 = vmatpush.msra.mxu0 0.0
    %158 = vmatpush.msra.mxu0 %v92
    %159 = vmatpush.msra.mxu0 %v91
    %160 = vmatpush.msra.mxu0 %v90
    %161 = vmatpush.msra.mxu0 %v89
    %162 = vmatmul.f32.gmra.mxu0 %v99
    %v163 = vpop.f32.mrf.mxu0
    %v164 = vadd.f32 %v95, %v163
    %165 = vmatmul.f32.gmra.mxu0 %v102
    %v166 = vpop.f32.mrf.mxu0
    %v167 = vadd.f32 %v95, %v166
    %168 = vmatmul.f32.gmra.mxu0 %v105
    %v169 = vpop.f32.mrf.mxu0
    %v170 = vadd.f32 %v95, %v169
    %171 = vmatmul.f32.gmra.mxu0 %v108
    %v172 = vpop.f32.mrf.mxu0
    %v173 = vadd.f32 %v95, %v172
    %174 = vmatmul.f32.gmra.mxu0 %v111
    %v175 = vpop.f32.mrf.mxu0
    %v176 = vadd.f32 %v95, %v175
    %177 = vmatmul.f32.gmra.mxu0 %v114
    %v178 = vpop.f32.mrf.mxu0
    %v179 = vadd.f32 %v95, %v178
    %180 = vmatmul.f32.gmra.mxu0 %v117
    %v181 = vpop.f32.mrf.mxu0
    %v182 = vadd.f32 %v95, %v181
    %183 = vmatmul.f32.gmra.mxu0 %v120
    %v184 = vpop.f32.mrf.mxu0
    %v185 = vadd.f32 %v95, %v184
    %186 = vmatmul.f32.gmra.mxu0 %v123
    %v187 = vpop.f32.mrf.mxu0
    %v188 = vadd.f32 %v95, %v187
    %189 = vmatmul.f32.gmra.mxu0 %v126
    %v190 = vpop.f32.mrf.mxu0
    %v191 = vadd.f32 %v95, %v190
    %192 = vmatmul.f32.gmra.mxu0 %v129
    %v193 = vpop.f32.mrf.mxu0
    %v194 = vadd.f32 %v95, %v193
    %195 = vmatmul.f32.gmra.mxu0 %v132
    %v196 = vpop.f32.mrf.mxu0
    %v197 = vadd.f32 %v95, %v196
    %198 = vmatmul.f32.gmra.mxu0 %v135
    %v199 = vpop.f32.mrf.mxu0
    %v200 = vadd.f32 %v95, %v199
    %201 = vmatmul.f32.gmra.mxu0 %v138
    %v202 = vpop.f32.mrf.mxu0
    %v203 = vadd.f32 %v95, %v202
    %204 = vmatmul.f32.gmra.mxu0 %v141
    %v205 = vpop.f32.mrf.mxu0
    %v206 = vadd.f32 %v95, %v205
    %207 = vmatmul.f32.gmra.mxu0 %v144
    %v208 = vpop.f32.mrf.mxu0
    %v209 = vadd.f32 %v95, %v208
    %210 = vdwg.mxu0
    %v211 = vld [vmem:[#allocation6] sm:$0xff]
    %v213 = vrot.slane %v211, 1
    %v214 = vrot.slane %v211, 2
    %v215 = vrot.slane %v211, 3
    %v216 = vrot.slane %v211, 4
    %v217 = vrot.slane %v211, 5
    %v218 = vrot.slane %v211, 6
    %v219 = vrot.slane %v211, 7
    %v220 = vperm.slane %v211, 0
    %v221 = vperm.slane %v213, 0
    %v222 = vperm.slane %v214, 0
    %v223 = vperm.slane %v215, 0
    %v224 = vperm.slane %v216, 0
    %v225 = vperm.slane %v217, 0
    %v226 = vperm.slane %v218, 0
    %v227 = vperm.slane %v219, 0
    %v236 = vadd.f32 %v164, %v220
    %v237 = vadd.f32 %v167, %v220
    %v238 = vadd.f32 %v170, %v221
    %v239 = vadd.f32 %v173, %v221
    %v240 = vadd.f32 %v176, %v222
    %v241 = vadd.f32 %v179, %v222
    %v242 = vadd.f32 %v182, %v223
    %v243 = vadd.f32 %v185, %v223
    %v244 = vadd.f32 %v188, %v224
    %v245 = vadd.f32 %v191, %v224
    %v246 = vadd.f32 %v194, %v225
    %v247 = vadd.f32 %v197, %v225
    %v248 = vadd.f32 %v200, %v226
    %v249 = vadd.f32 %v203, %v226
    %v250 = vadd.f32 %v206, %v227
    %v251 = vadd.f32 %v209, %v227
    %v252 = vmax.f32 %v236, 0.0
    %v253 = vmax.f32 %v237, 0.0
    %v254 = vmax.f32 %v238, 0.0
    %v255 = vmax.f32 %v239, 0.0
    %v256 = vmax.f32 %v240, 0.0
    %v257 = vmax.f32 %v241, 0.0
    %v258 = vmax.f32 %v242, 0.0
    %v259 = vmax.f32 %v243, 0.0
    %v260 = vmax.f32 %v244, 0.0
    %v261 = vmax.f32 %v245, 0.0
    %v262 = vmax.f32 %v246, 0.0
    %v263 = vmax.f32 %v247, 0.0
    %v264 = vmax.f32 %v248, 0.0
    %v265 = vmax.f32 %v249, 0.0
    %v266 = vmax.f32 %v250, 0.0
    %v267 = vmax.f32 %v251, 0.0
    %v268 = vld [vmem:[%s4] sm:$0x1]
    %v270 = vperm.slane %v268, 0
    %v272 = vmul.f32 %v252, %v270
    %v273 = vmul.f32 %v253, %v270
    %v274 = vmul.f32 %v254, %v270
    %v275 = vmul.f32 %v255, %v270
    %v276 = vmul.f32 %v256, %v270
    %v277 = vmul.f32 %v257, %v270
    %v278 = vmul.f32 %v258, %v270
    %v279 = vmul.f32 %v259, %v270
    %v280 = vmul.f32 %v260, %v270
    %v281 = vmul.f32 %v261, %v270
    %v282 = vmul.f32 %v262, %v270
    %v283 = vmul.f32 %v263, %v270
    %v284 = vmul.f32 %v264, %v270
    %v285 = vmul.f32 %v265, %v270
    %v286 = vmul.f32 %v266, %v270
    %v287 = vmul.f32 %v267, %v270
    %v288 = vsel %vm97, %v272, 0.0
    %289 = vadd.xlane.f32.xlu0 %v288
    %v290 = vpop.xlane.xlu0 %289
    %v291 = vsel %vm97, %v273, 0.0
    %292 = vadd.xlane.f32.xlu0 %v291
    %v293 = vpop.xlane.xlu0 %292
    %v294 = vsel %vm97, %v274, 0.0
    %295 = vadd.xlane.f32.xlu0 %v294
    %v296 = vpop.xlane.xlu0 %295
    %v297 = vsel %vm97, %v275, 0.0
    %298 = vadd.xlane.f32.xlu0 %v297
    %v299 = vpop.xlane.xlu0 %298
    %v300 = vsel %vm97, %v276, 0.0
    %301 = vadd.xlane.f32.xlu0 %v300
    %v302 = vpop.xlane.xlu0 %301
    %v303 = vsel %vm97, %v277, 0.0
    %304 = vadd.xlane.f32.xlu0 %v303
    %v305 = vpop.xlane.xlu0 %304
    %v306 = vsel %vm97, %v278, 0.0
    %307 = vadd.xlane.f32.xlu0 %v306
    %v308 = vpop.xlane.xlu0 %307
    %v309 = vsel %vm97, %v279, 0.0
    %310 = vadd.xlane.f32.xlu0 %v309
    %v311 = vpop.xlane.xlu0 %310
    %v312 = vsel %vm97, %v280, 0.0
    %313 = vadd.xlane.f32.xlu0 %v312
    %v314 = vpop.xlane.xlu0 %313
    %v315 = vsel %vm97, %v281, 0.0
    %316 = vadd.xlane.f32.xlu0 %v315
    %v317 = vpop.xlane.xlu0 %316
    %v318 = vsel %vm97, %v282, 0.0
    %319 = vadd.xlane.f32.xlu0 %v318
    %v320 = vpop.xlane.xlu0 %319
    %v321 = vsel %vm97, %v283, 0.0
    %322 = vadd.xlane.f32.xlu0 %v321
    %v323 = vpop.xlane.xlu0 %322
    %v324 = vsel %vm97, %v284, 0.0
    %325 = vadd.xlane.f32.xlu0 %v324
    %v326 = vpop.xlane.xlu0 %325
    %v327 = vsel %vm97, %v285, 0.0
    %328 = vadd.xlane.f32.xlu0 %v327
    %v329 = vpop.xlane.xlu0 %328
    %v330 = vsel %vm97, %v286, 0.0
    %331 = vadd.xlane.f32.xlu0 %v330
    %v332 = vpop.xlane.xlu0 %331
    %v333 = vsel %vm97, %v287, 0.0
    %334 = vadd.xlane.f32.xlu0 %v333
    %v335 = vpop.xlane.xlu0 %334
    %s336 = sld [smem:[#allocation2]]
    %v337 = vstv %s336
    %v338 = vadd.f32 %v290, %v337
    %v339 = vadd.f32 %v293, %v337
    %v340 = vadd.f32 %v296, %v337
    %v341 = vadd.f32 %v299, %v337
    %v342 = vadd.f32 %v302, %v337
    %v343 = vadd.f32 %v305, %v337
    %v344 = vadd.f32 %v308, %v337
    %v345 = vadd.f32 %v311, %v337
    %v346 = vadd.f32 %v314, %v337
    %v347 = vadd.f32 %v317, %v337
    %v348 = vadd.f32 %v320, %v337
    %v349 = vadd.f32 %v323, %v337
    %v350 = vadd.f32 %v326, %v337
    %v351 = vadd.f32 %v329, %v337
    %v352 = vadd.f32 %v332, %v337
    %v353 = vadd.f32 %v335, %v337
    %v370 = vlaneseq
    %v371 = vand.u32 %v370, 127
    %v372 = vperm.slane %v338, %v371
    %v373 = vadd.s32 %v371, 4294967288
    %v374 = vperm.slane %v339, %v373
    %vm375 = vcmask 130112
    %v376 = vsel %vm375, %v374, %v372
    %v377 = vperm.slane %v340, %v371
    %v378 = vperm.slane %v341, %v373
    %v379 = vsel %vm375, %v378, %v377
    %v380 = vperm.slane %v342, %v371
    %v381 = vperm.slane %v343, %v373
    %v382 = vsel %vm375, %v381, %v380
    %v383 = vperm.slane %v344, %v371
    %v384 = vperm.slane %v345, %v373
    %v385 = vsel %vm375, %v384, %v383
    %v386 = vperm.slane %v346, %v371
    %v387 = vperm.slane %v347, %v373
    %v388 = vsel %vm375, %v387, %v386
    %v389 = vperm.slane %v348, %v371
    %v390 = vperm.slane %v349, %v373
    %v391 = vsel %vm375, %v390, %v389
    %v392 = vperm.slane %v350, %v371
    %v393 = vperm.slane %v351, %v373
    %v394 = vsel %vm375, %v393, %v392
    %v395 = vperm.slane %v352, %v371
    %v396 = vperm.slane %v353, %v373
    %v397 = vsel %vm375, %v396, %v395
    %vm398 = vcmask 1041409
    %v399 = vsel %vm398, %v379, %v376
    %vm400 = vcmask 1042434
    %v401 = vsel %vm400, %v382, %v399
    %vm402 = vcmask 1043459
    %v403 = vsel %vm402, %v385, %v401
    %vm404 = vcmask 1044484
    %v405 = vsel %vm404, %v388, %v403
    %vm406 = vcmask 1045509
    %v407 = vsel %vm406, %v391, %v405
    %vm408 = vcmask 1046534
    %v409 = vsel %vm408, %v394, %v407
    %vm410 = vcmask 1047559
    %v411 = vsel %vm410, %v397, %v409
    %vm413 = vcmask 130048
    %v414 = vsel %vm413, %v411, -inf
    %415 = vmax.xlane.f32.xlu0 %v414
    %v416 = vpop.xlane.xlu0 %415
    %v418 = vperm.slane %v416, 0
    %v419 = vperm.slane %v416, 1
    %v420 = vperm.slane %v416, 2
    %v421 = vperm.slane %v416, 3
    %v422 = vperm.slane %v416, 4
    %v423 = vperm.slane %v416, 5
    %v424 = vperm.slane %v416, 6
    %v425 = vperm.slane %v416, 7
    %v434 = vsub.f32 %v338, %v418
    %v435 = vsub.f32 %v339, %v418
    %v436 = vsub.f32 %v340, %v419
    %v437 = vsub.f32 %v341, %v419
    %v438 = vsub.f32 %v342, %v420
    %v439 = vsub.f32 %v343, %v420
    %v440 = vsub.f32 %v344, %v421
    %v441 = vsub.f32 %v345, %v421
    %v442 = vsub.f32 %v346, %v422
    %v443 = vsub.f32 %v347, %v422
    %v444 = vsub.f32 %v348, %v423
    %v445 = vsub.f32 %v349, %v423
    %v446 = vsub.f32 %v350, %v424
    %v447 = vsub.f32 %v351, %v424
    %v448 = vsub.f32 %v352, %v425
    %v449 = vsub.f32 %v353, %v425
    %v450 = vmul.f32 %v434, 1.442695
    %v451 = vpow.pop %v450
    %v452 = vmul.f32 %v435, 1.442695
    %v453 = vpow.pop %v452
    %v454 = vmul.f32 %v436, 1.442695
    %v455 = vpow.pop %v454
    %v456 = vmul.f32 %v437, 1.442695
    %v457 = vpow.pop %v456
    %v458 = vmul.f32 %v438, 1.442695
    %v459 = vpow.pop %v458
    %v460 = vmul.f32 %v439, 1.442695
    %v461 = vpow.pop %v460
    %v462 = vmul.f32 %v440, 1.442695
    %v463 = vpow.pop %v462
    %v464 = vmul.f32 %v441, 1.442695
    %v465 = vpow.pop %v464
    %v466 = vmul.f32 %v442, 1.442695
    %v467 = vpow.pop %v466
    %v468 = vmul.f32 %v443, 1.442695
    %v469 = vpow.pop %v468
    %v470 = vmul.f32 %v444, 1.442695
    %v471 = vpow.pop %v470
    %v472 = vmul.f32 %v445, 1.442695
    %v473 = vpow.pop %v472
    %v474 = vmul.f32 %v446, 1.442695
    %v475 = vpow.pop %v474
    %v476 = vmul.f32 %v447, 1.442695
    %v477 = vpow.pop %v476
    %v478 = vmul.f32 %v448, 1.442695
    %v479 = vpow.pop %v478
    %v480 = vmul.f32 %v449, 1.442695
    %v481 = vpow.pop %v480
    %498 = vset.pattern.permute.xlu0 0
    %499 = vperm.xlu0 %498, %v451
    %v500 = vpop.permute.xlu0 %499
    %501 = vset.pattern.permute.xlu0 0
    %502 = vperm.xlu0 %501, %v453
    %v503 = vpop.permute.xlu0 %502
    %504 = vset.pattern.permute.xlu0 0
    %505 = vperm.xlu0 %504, %v455
    %v506 = vpop.permute.xlu0 %505
    %507 = vset.pattern.permute.xlu0 0
    %508 = vperm.xlu0 %507, %v457
    %v509 = vpop.permute.xlu0 %508
    %510 = vset.pattern.permute.xlu0 0
    %511 = vperm.xlu0 %510, %v459
    %v512 = vpop.permute.xlu0 %511
    %513 = vset.pattern.permute.xlu0 0
    %514 = vperm.xlu0 %513, %v461
    %v515 = vpop.permute.xlu0 %514
    %516 = vset.pattern.permute.xlu0 0
    %517 = vperm.xlu0 %516, %v463
    %v518 = vpop.permute.xlu0 %517
    %519 = vset.pattern.permute.xlu0 0
    %520 = vperm.xlu0 %519, %v465
    %v521 = vpop.permute.xlu0 %520
    %522 = vset.pattern.permute.xlu0 0
    %523 = vperm.xlu0 %522, %v467
    %v524 = vpop.permute.xlu0 %523
    %525 = vset.pattern.permute.xlu0 0
    %526 = vperm.xlu0 %525, %v469
    %v527 = vpop.permute.xlu0 %526
    %528 = vset.pattern.permute.xlu0 0
    %529 = vperm.xlu0 %528, %v471
    %v530 = vpop.permute.xlu0 %529
    %531 = vset.pattern.permute.xlu0 0
    %532 = vperm.xlu0 %531, %v473
    %v533 = vpop.permute.xlu0 %532
    %534 = vset.pattern.permute.xlu0 0
    %535 = vperm.xlu0 %534, %v475
    %v536 = vpop.permute.xlu0 %535
    %537 = vset.pattern.permute.xlu0 0
    %538 = vperm.xlu0 %537, %v477
    %v539 = vpop.permute.xlu0 %538
    %540 = vset.pattern.permute.xlu0 0
    %541 = vperm.xlu0 %540, %v479
    %v542 = vpop.permute.xlu0 %541
    %543 = vset.pattern.permute.xlu0 0
    %544 = vperm.xlu0 %543, %v481
    %v545 = vpop.permute.xlu0 %544
    %v546 = vperm.slane %v500, %v371
    %v547 = vperm.slane %v503, %v373
    %v548 = vsel %vm375, %v547, %v546
    %v549 = vperm.slane %v506, %v371
    %v550 = vperm.slane %v509, %v373
    %v551 = vsel %vm375, %v550, %v549
    %v552 = vperm.slane %v512, %v371
    %v553 = vperm.slane %v515, %v373
    %v554 = vsel %vm375, %v553, %v552
    %v555 = vperm.slane %v518, %v371
    %v556 = vperm.slane %v521, %v373
    %v557 = vsel %vm375, %v556, %v555
    %v558 = vperm.slane %v524, %v371
    %v559 = vperm.slane %v527, %v373
    %v560 = vsel %vm375, %v559, %v558
    %v561 = vperm.slane %v530, %v371
    %v562 = vperm.slane %v533, %v373
    %v563 = vsel %vm375, %v562, %v561
    %v564 = vperm.slane %v536, %v371
    %v565 = vperm.slane %v539, %v373
    %v566 = vsel %vm375, %v565, %v564
    %v567 = vperm.slane %v542, %v371
    %v568 = vperm.slane %v545, %v373
    %v569 = vsel %vm375, %v568, %v567
    %v570 = vsel %vm398, %v551, %v548
    %v571 = vsel %vm400, %v554, %v570
    %v572 = vsel %vm402, %v557, %v571
    %v573 = vsel %vm404, %v560, %v572
    %v574 = vsel %vm406, %v563, %v573
    %v575 = vsel %vm408, %v566, %v574
    %v576 = vsel %vm410, %v569, %v575
    %v578 = vsel %vm413, %v576, 0.0
    %579 = vadd.xlane.f32.xlu0 %v578
    %v580 = vpop.xlane.xlu0 %579
    %v581 = vrcp.pop %v580
    %v582 = vmul.f32 %v580, %v581
    %v583 = vsub.f32 1.0, %v582
    %v584 = vmul.f32 %v581, %v583
    %v585 = vadd.f32 %v581, %v584
    %vm586 = vweird.f32 %v580
    %vm587 = vweird.f32 %v581
    %vm588 = vmor %vm586, %vm587
    %v589 = vsel %vm588, %v581, %v585
    %v590 = vand.u32 2147483647, %v580
    %vm591 = vcmp.eq.f32.partialorder %v590, 8.507059e+37
    %v592 = vand.u32 %v580, 2147483648
    %v593 = vor.u32 1.1754944e-38, %v592
    %v594 = vsel %vm591, %v593, %v589
    %v596 = vperm.slane %v594, 0
    %v597 = vperm.slane %v594, 1
    %v598 = vperm.slane %v594, 2
    %v599 = vperm.slane %v594, 3
    %v600 = vperm.slane %v594, 4
    %v601 = vperm.slane %v594, 5
    %v602 = vperm.slane %v594, 6
    %v603 = vperm.slane %v594, 7
    %v612 = vmul.f32 %v451, %v596
    %v613 = vmul.f32 %v453, %v596
    %v614 = vmul.f32 %v455, %v597
    %v615 = vmul.f32 %v457, %v597
    %v616 = vmul.f32 %v459, %v598
    %v617 = vmul.f32 %v461, %v598
    %v618 = vmul.f32 %v463, %v599
    %v619 = vmul.f32 %v465, %v599
    %v620 = vmul.f32 %v467, %v600
    %v621 = vmul.f32 %v469, %v600
    %v622 = vmul.f32 %v471, %v601
    %v623 = vmul.f32 %v473, %v601
    %v624 = vmul.f32 %v475, %v602
    %v625 = vmul.f32 %v477, %v602
    %v626 = vmul.f32 %v479, %v603
    %v627 = vmul.f32 %v481, %v603
    %630 = vset.pattern.permute.xlu0 0
    %631 = vperm.xlu0 %630, %v612
    %v632 = vpop.permute.xlu0 %631
    %633 = vset.pattern.permute.xlu0 0
    %634 = vperm.xlu0 %633, %v613
    %v635 = vpop.permute.xlu0 %634
    %v636 = vperm.slane %v632, %v371
    %v637 = vperm.slane %v635, %v373
    %v638 = vsel %vm375, %v637, %v636
    %v639 = vsel %vm413, %v638, 0
    %641 = vmatpush.msra.mxu0 0.0
    %642 = vmatpush.msra.mxu0 0.0
    %643 = vmatpush.msra.mxu0 0.0
    %644 = vmatpush.msra.mxu0 0.0
    %645 = vmatpush.msra.mxu0 0.0
    %646 = vmatpush.msra.mxu0 0.0
    %647 = vmatpush.msra.mxu0 0.0
    %648 = vmatpush.msra.mxu0 0.0
    %649 = vmatpush.msra.mxu0 0.0
    %650 = vmatpush.msra.mxu0 0.0
    %651 = vmatpush.msra.mxu0 0.0
    %652 = vmatpush.msra.mxu0 0.0
    %653 = vmatpush.msra.mxu0 0.0
    %654 = vmatpush.msra.mxu0 0.0
    %655 = vmatpush.msra.mxu0 %v74
    %656 = vmatpush.msra.mxu0 %v73
    %657 = vmatmul.f32.gmra.mxu0 %v639
    %v658 = vpop.f32.mrf.mxu0
    %v659 = vadd.f32 0.0, %v658
    %660 = vdwg.mxu0
    %663 = vset.pattern.permute.xlu0 0
    %664 = vperm.xlu0 %663, %v614
    %v665 = vpop.permute.xlu0 %664
    %666 = vset.pattern.permute.xlu0 0
    %667 = vperm.xlu0 %666, %v615
    %v668 = vpop.permute.xlu0 %667
    %v669 = vperm.slane %v665, %v371
    %v670 = vperm.slane %v668, %v373
    %v671 = vsel %vm375, %v670, %v669
    %v672 = vsel %vm413, %v671, 0
    %674 = vmatpush.msra.mxu0 0.0
    %675 = vmatpush.msra.mxu0 0.0
    %676 = vmatpush.msra.mxu0 0.0
    %677 = vmatpush.msra.mxu0 0.0
    %678 = vmatpush.msra.mxu0 0.0
    %679 = vmatpush.msra.mxu0 0.0
    %680 = vmatpush.msra.mxu0 0.0
    %681 = vmatpush.msra.mxu0 0.0
    %682 = vmatpush.msra.mxu0 0.0
    %683 = vmatpush.msra.mxu0 0.0
    %684 = vmatpush.msra.mxu0 0.0
    %685 = vmatpush.msra.mxu0 0.0
    %686 = vmatpush.msra.mxu0 0.0
    %687 = vmatpush.msra.mxu0 0.0
    %688 = vmatpush.msra.mxu0 %v76
    %689 = vmatpush.msra.mxu0 %v75
    %690 = vmatmul.f32.gmra.mxu0 %v672
    %v691 = vpop.f32.mrf.mxu0
    %v692 = vadd.f32 0.0, %v691
    %693 = vdwg.mxu0
    %696 = vset.pattern.permute.xlu0 0
    %697 = vperm.xlu0 %696, %v616
    %v698 = vpop.permute.xlu0 %697
    %699 = vset.pattern.permute.xlu0 0
    %700 = vperm.xlu0 %699, %v617
    %v701 = vpop.permute.xlu0 %700
    %v702 = vperm.slane %v698, %v371
    %v703 = vperm.slane %v701, %v373
    %v704 = vsel %vm375, %v703, %v702
    %v705 = vsel %vm413, %v704, 0
    %707 = vmatpush.msra.mxu0 0.0
    %708 = vmatpush.msra.mxu0 0.0
    %709 = vmatpush.msra.mxu0 0.0
    %710 = vmatpush.msra.mxu0 0.0
    %711 = vmatpush.msra.mxu0 0.0
    %712 = vmatpush.msra.mxu0 0.0
    %713 = vmatpush.msra.mxu0 0.0
    %714 = vmatpush.msra.mxu0 0.0
    %715 = vmatpush.msra.mxu0 0.0
    %716 = vmatpush.msra.mxu0 0.0
    %717 = vmatpush.msra.mxu0 0.0
    %718 = vmatpush.msra.mxu0 0.0
    %719 = vmatpush.msra.mxu0 0.0
    %720 = vmatpush.msra.mxu0 0.0
    %721 = vmatpush.msra.mxu0 %v78
    %722 = vmatpush.msra.mxu0 %v77
    %723 = vmatmul.f32.gmra.mxu0 %v705
    %v724 = vpop.f32.mrf.mxu0
    %v725 = vadd.f32 0.0, %v724
    %726 = vdwg.mxu0
    %729 = vset.pattern.permute.xlu0 0
    %730 = vperm.xlu0 %729, %v618
    %v731 = vpop.permute.xlu0 %730
    %732 = vset.pattern.permute.xlu0 0
    %733 = vperm.xlu0 %732, %v619
    %v734 = vpop.permute.xlu0 %733
    %v735 = vperm.slane %v731, %v371
    %v736 = vperm.slane %v734, %v373
    %v737 = vsel %vm375, %v736, %v735
    %v738 = vsel %vm413, %v737, 0
    %740 = vmatpush.msra.mxu0 0.0
    %741 = vmatpush.msra.mxu0 0.0
    %742 = vmatpush.msra.mxu0 0.0
    %743 = vmatpush.msra.mxu0 0.0
    %744 = vmatpush.msra.mxu0 0.0
    %745 = vmatpush.msra.mxu0 0.0
    %746 = vmatpush.msra.mxu0 0.0
    %747 = vmatpush.msra.mxu0 0.0
    %748 = vmatpush.msra.mxu0 0.0
    %749 = vmatpush.msra.mxu0 0.0
    %750 = vmatpush.msra.mxu0 0.0
    %751 = vmatpush.msra.mxu0 0.0
    %752 = vmatpush.msra.mxu0 0.0
    %753 = vmatpush.msra.mxu0 0.0
    %754 = vmatpush.msra.mxu0 %v80
    %755 = vmatpush.msra.mxu0 %v79
    %756 = vmatmul.f32.gmra.mxu0 %v738
    %v757 = vpop.f32.mrf.mxu0
    %v758 = vadd.f32 0.0, %v757
    %759 = vdwg.mxu0
    %762 = vset.pattern.permute.xlu0 0
    %763 = vperm.xlu0 %762, %v620
    %v764 = vpop.permute.xlu0 %763
    %765 = vset.pattern.permute.xlu0 0
    %766 = vperm.xlu0 %765, %v621
    %v767 = vpop.permute.xlu0 %766
    %v768 = vperm.slane %v764, %v371
    %v769 = vperm.slane %v767, %v373
    %v770 = vsel %vm375, %v769, %v768
    %v771 = vsel %vm413, %v770, 0
    %773 = vmatpush.msra.mxu0 0.0
    %774 = vmatpush.msra.mxu0 0.0
    %775 = vmatpush.msra.mxu0 0.0
    %776 = vmatpush.msra.mxu0 0.0
    %777 = vmatpush.msra.mxu0 0.0
    %778 = vmatpush.msra.mxu0 0.0
    %779 = vmatpush.msra.mxu0 0.0
    %780 = vmatpush.msra.mxu0 0.0
    %781 = vmatpush.msra.mxu0 0.0
    %782 = vmatpush.msra.mxu0 0.0
    %783 = vmatpush.msra.mxu0 0.0
    %784 = vmatpush.msra.mxu0 0.0
    %785 = vmatpush.msra.mxu0 0.0
    %786 = vmatpush.msra.mxu0 0.0
    %787 = vmatpush.msra.mxu0 %v82
    %788 = vmatpush.msra.mxu0 %v81
    %789 = vmatmul.f32.gmra.mxu0 %v771
    %v790 = vpop.f32.mrf.mxu0
    %v791 = vadd.f32 0.0, %v790
    %792 = vdwg.mxu0
    %795 = vset.pattern.permute.xlu0 0
    %796 = vperm.xlu0 %795, %v622
    %v797 = vpop.permute.xlu0 %796
    %798 = vset.pattern.permute.xlu0 0
    %799 = vperm.xlu0 %798, %v623
    %v800 = vpop.permute.xlu0 %799
    %v801 = vperm.slane %v797, %v371
    %v802 = vperm.slane %v800, %v373
    %v803 = vsel %vm375, %v802, %v801
    %v804 = vsel %vm413, %v803, 0
    %806 = vmatpush.msra.mxu0 0.0
    %807 = vmatpush.msra.mxu0 0.0
    %808 = vmatpush.msra.mxu0 0.0
    %809 = vmatpush.msra.mxu0 0.0
    %810 = vmatpush.msra.mxu0 0.0
    %811 = vmatpush.msra.mxu0 0.0
    %812 = vmatpush.msra.mxu0 0.0
    %813 = vmatpush.msra.mxu0 0.0
    %814 = vmatpush.msra.mxu0 0.0
    %815 = vmatpush.msra.mxu0 0.0
    %816 = vmatpush.msra.mxu0 0.0
    %817 = vmatpush.msra.mxu0 0.0
    %818 = vmatpush.msra.mxu0 0.0
    %819 = vmatpush.msra.mxu0 0.0
    %820 = vmatpush.msra.mxu0 %v84
    %821 = vmatpush.msra.mxu0 %v83
    %822 = vmatmul.f32.gmra.mxu0 %v804
    %v823 = vpop.f32.mrf.mxu0
    %v824 = vadd.f32 0.0, %v823
    %825 = vdwg.mxu0
    %828 = vset.pattern.permute.xlu0 0
    %829 = vperm.xlu0 %828, %v624
    %v830 = vpop.permute.xlu0 %829
    %831 = vset.pattern.permute.xlu0 0
    %832 = vperm.xlu0 %831, %v625
    %v833 = vpop.permute.xlu0 %832
    %v834 = vperm.slane %v830, %v371
    %v835 = vperm.slane %v833, %v373
    %v836 = vsel %vm375, %v835, %v834
    %v837 = vsel %vm413, %v836, 0
    %839 = vmatpush.msra.mxu0 0.0
    %840 = vmatpush.msra.mxu0 0.0
    %841 = vmatpush.msra.mxu0 0.0
    %842 = vmatpush.msra.mxu0 0.0
    %843 = vmatpush.msra.mxu0 0.0
    %844 = vmatpush.msra.mxu0 0.0
    %845 = vmatpush.msra.mxu0 0.0
    %846 = vmatpush.msra.mxu0 0.0
    %847 = vmatpush.msra.mxu0 0.0
    %848 = vmatpush.msra.mxu0 0.0
    %849 = vmatpush.msra.mxu0 0.0
    %850 = vmatpush.msra.mxu0 0.0
    %851 = vmatpush.msra.mxu0 0.0
    %852 = vmatpush.msra.mxu0 0.0
    %853 = vmatpush.msra.mxu0 %v86
    %854 = vmatpush.msra.mxu0 %v85
    %855 = vmatmul.f32.gmra.mxu0 %v837
    %v856 = vpop.f32.mrf.mxu0
    %v857 = vadd.f32 0.0, %v856
    %858 = vdwg.mxu0
    %861 = vset.pattern.permute.xlu0 0
    %862 = vperm.xlu0 %861, %v626
    %v863 = vpop.permute.xlu0 %862
    %864 = vset.pattern.permute.xlu0 0
    %865 = vperm.xlu0 %864, %v627
    %v866 = vpop.permute.xlu0 %865
    %v867 = vperm.slane %v863, %v371
    %v868 = vperm.slane %v866, %v373
    %v869 = vsel %vm375, %v868, %v867
    %v870 = vsel %vm413, %v869, 0
    %872 = vmatpush.msra.mxu0 0.0
    %873 = vmatpush.msra.mxu0 0.0
    %874 = vmatpush.msra.mxu0 0.0
    %875 = vmatpush.msra.mxu0 0.0
    %876 = vmatpush.msra.mxu0 0.0
    %877 = vmatpush.msra.mxu0 0.0
    %878 = vmatpush.msra.mxu0 0.0
    %879 = vmatpush.msra.mxu0 0.0
    %880 = vmatpush.msra.mxu0 0.0
    %881 = vmatpush.msra.mxu0 0.0
    %882 = vmatpush.msra.mxu0 0.0
    %883 = vmatpush.msra.mxu0 0.0
    %884 = vmatpush.msra.mxu0 0.0
    %885 = vmatpush.msra.mxu0 0.0
    %886 = vmatpush.msra.mxu0 %v88
    %887 = vmatpush.msra.mxu0 %v87
    %888 = vmatmul.f32.gmra.mxu0 %v870
    %v889 = vpop.f32.mrf.mxu0
    %v890 = vadd.f32 0.0, %v889
    %891 = vdwg.mxu0
    %v900 = vrot.slane %v692, 7
    %v901 = vsel %vm398, %v900, %v659
    %v902 = vrot.slane %v725, 6
    %v903 = vsel %vm400, %v902, %v901
    %v904 = vrot.slane %v758, 5
    %v905 = vsel %vm402, %v904, %v903
    %v906 = vrot.slane %v791, 4
    %v907 = vsel %vm404, %v906, %v905
    %v908 = vrot.slane %v824, 3
    %v909 = vsel %vm406, %v908, %v907
    %v910 = vrot.slane %v857, 2
    %v911 = vsel %vm408, %v910, %v909
    %v912 = vrot.slane %v890, 1
    %v913 = vsel %vm410, %v912, %v911
    %v915 = vsel %vm97, %v913, 0.0
    %v916 = vsel %vm398, %v671, %v638
    %v917 = vsel %vm400, %v704, %v916
    %v918 = vsel %vm402, %v737, %v917
    %v919 = vsel %vm404, %v770, %v918
    %v920 = vsel %vm406, %v803, %v919
    %v921 = vsel %vm408, %v836, %v920
    %v922 = vsel %vm410, %v869, %v921
    %v924 = vsel %vm413, %v922, 0.0
    %925 = vst [vmem:[#allocation9] sm:$0xff] %v915
    %926 = vst [vmem:[#allocation10] sm:$0xff] %v924
    // Predicated region
    $region38: #{tpu_custom_call.1} parent=1 // pred_check
      _
    $region39: #{tpu_custom_call.1} parent=1 // pred_check_branch
      %928 = sbr.rel (0) target = $region41
    $region40: #{tpu_custom_call.1} parent=1 // pred_region
      %930 = vsyncadd [#allocation5], 0
      %s932 = sshll.u32 [#allocation9], 4
      %s933 = int_to_ptr.vmem [resolvable:$true] %s932
      %s934 = sshll.u32 %s6, 4
      %s935 = int_to_ptr.hbm [resolvable:$true] %s934
      %937 = dma.vmem_to_hbm [thread:$0]  %s933, 128, %s935, [#allocation5]
    $region41: #{tpu_custom_call.1} parent=1 // pred_fallthru
      _
    // Predicated region
    $region42: #{tpu_custom_call.1} parent=1 // pred_check
      _
    $region43: #{tpu_custom_call.1} parent=1 // pred_check_branch
      %939 = sbr.rel (0) target = $region45
    $region44: #{tpu_custom_call.1} parent=1 // pred_region
      %941 = vsyncadd [#allocation11], 0
      %s943 = sshll.u32 [#allocation10], 4
      %s944 = int_to_ptr.vmem [resolvable:$true] %s943
      %s945 = sshll.u32 %s7, 4
      %s946 = int_to_ptr.hbm [resolvable:$true] %s945
      %948 = dma.vmem_to_hbm [thread:$0]  %s944, 128, %s946, [#allocation11]
    $region45: #{tpu_custom_call.1} parent=1 // pred_fallthru
      _
    // Predicated region
    $region46: #{tpu_custom_call.1} parent=1 // pred_check
      _
    $region47: #{tpu_custom_call.1} parent=1 // pred_check_branch
      %950 = sbr.rel (0) target = $region49
    $region48: #{tpu_custom_call.1} parent=1 // pred_region
      %952 = dma.done [#allocation5], 128
    $region49: #{tpu_custom_call.1} parent=1 // pred_fallthru
      _
    // Predicated region
    $region50: #{tpu_custom_call.1} parent=1 // pred_check
      _
    $region51: #{tpu_custom_call.1} parent=1 // pred_check_branch
      %954 = sbr.rel (0) target = $region53
    $region52: #{tpu_custom_call.1} parent=1 // pred_region
      %956 = dma.done [#allocation11], 128
    $region53: #{tpu_custom_call.1} parent=1 // pred_fallthru
      _
    %957 = vsyncpa [#allocation4], 1
    %958 = vsyncpa [#allocation7], 1
    %959 = vsyncpa [#allocation5], 1
    %960 = vsyncpa [#allocation11], 1

// kernel: tpu_custom_call.1
$region0: #{tpu_custom_call.1}
  #allocation0 [shape = 'u32[]', space=smem, size = 0x4, offset = 0x4, fixed_abs, tag = 'smem constant byte address 0x4 - core index']
  #allocation1 [shape = 'u32[72,128]{1,0:T(1,128)}', space=vmem, size = 0x9000, scoped, tag = 'internal scratch']
  #allocation2 [shape = 'f32[1,1]{1,0:T(1,128)S(6)}', space=smem, size = 0x200, scoped, tag = 'scoped memory for tpu_custom_call.1']
  %s0 = inlined_call_operand.hbm [shape: f32[8,16,32], index: 0, kind: input, shape index: {}]
  %s1 = inlined_call_operand.hbm [shape: f32[8,32], index: 1, kind: input, shape index: {}]
  %s2 = inlined_call_operand.hbm [shape: f32[32,32], index: 2, kind: input, shape index: {}]
  %s3 = inlined_call_operand.vmem [shape: f32[1,32], index: 3, kind: input, shape index: {}]
  %s4 = inlined_call_operand.vmem [shape: f32[1,32], index: 4, kind: input, shape index: {}]
  %s5 = inlined_call_operand.<no memory space> [shape: f32[1,1], index: 5, kind: input, shape index: {}]
  %s6 = inlined_call_operand.hbm [shape: f32[8,128], index: 6, kind: output, shape index: {0}]
  %s7 = inlined_call_operand.hbm [shape: f32[8,128], index: 7, kind: output, shape index: {1}]
  %8 = xla_tuple %s6, %s7
  %s9 = sld [smem:[#allocation0]]
  $region54: #{tpu_custom_call.1} parent=0
    _
  %s11 = ssub.s32 1, %s9
  %s12 = scalar_select 0, %s11, %s9
  %13 = sst [smem:[#allocation2]] %s5
  $region1: #{tpu_custom_call.1} parent=0
    #allocation3 [shape = 'u8[65536]{0}', space=vmem, size = 0x10000, scoped, tag = 'input window, operand 0, single buffered']
    #allocation4 [shape = 's32[1]{0}', space=sflag, size = 0x4, scoped, tag = 'scoped memory for tpu_custom_call.1']
    #allocation5 [shape = 's32[1]{0}', space=sflag, size = 0x4, scoped, tag = 'scoped memory for tpu_custom_call.1']
    #allocation6 [shape = 'u8[4096]{0}', space=vmem, size = 0x1000, scoped, tag = 'input window, operand 1, single buffered']
    #allocation7 [shape = 's32[1]{0}', space=sflag, size = 0x4, scoped, tag = 'scoped memory for tpu_custom_call.1']
    #allocation8 [shape = 'u8[16384]{0}', space=vmem, size = 0x4000, scoped, tag = 'input window, operand 2, single buffered']
    #allocation9 [shape = 'u8[4096]{0}', space=vmem, size = 0x1000, scoped, tag = 'output window, operand 0, single buffered']
    #allocation10 [shape = 'u8[4096]{0}', space=vmem, size = 0x1000, scoped, tag = 'output window, operand 1, single buffered']
    #allocation11 [shape = 's32[1]{0}', space=sflag, size = 0x4, scoped, tag = 'scoped memory for tpu_custom_call.1']
    %14 = vsyncpa [#allocation4], 0
    %15 = vsyncpa [#allocation7], 0
    %16 = vsyncpa [#allocation5], 0
    %17 = vsyncpa [#allocation11], 0
    // Predicated region
    $region2: #{tpu_custom_call.1} parent=1 // pred_check
      _
    $region3: #{tpu_custom_call.1} parent=1 // pred_check_branch
      %19 = sbr.rel (0) target = $region5
    $region4: #{tpu_custom_call.1} parent=1 // pred_region
      %21 = vsyncadd [#allocation4], 0
      %s22 = sshll.u32 %s0, 4
      %s23 = int_to_ptr.hbm [resolvable:$true] %s22
      %s24 = sshll.u32 [#allocation3], 4
      %s25 = int_to_ptr.vmem [resolvable:$true] %s24
      %30 = dma.hbm_to_vmem [thread:$0]  %s23, 2048, %s25, [#allocation4], 128, 128, 8
    $region5: #{tpu_custom_call.1} parent=1 // pred_fallthru
      _
    // Predicated region
    $region6: #{tpu_custom_call.1} parent=1 // pred_check
      _
    $region7: #{tpu_custom_call.1} parent=1 // pred_check_branch
      %32 = sbr.rel (0) target = $region9
    $region8: #{tpu_custom_call.1} parent=1 // pred_region
      %34 = vsyncadd [#allocation7], 0
      %s36 = sshll.u32 %s1, 4
      %s37 = int_to_ptr.hbm [resolvable:$true] %s36
      %s38 = sshll.u32 [#allocation6], 4
      %s39 = int_to_ptr.vmem [resolvable:$true] %s38
      %41 = dma.hbm_to_vmem [thread:$0]  %s37, 128, %s39, [#allocation7]
    $region9: #{tpu_custom_call.1} parent=1 // pred_fallthru
      _
    // Predicated region
    $region10: #{tpu_custom_call.1} parent=1 // pred_check
      _
    $region11: #{tpu_custom_call.1} parent=1 // pred_check_branch
      %43 = sbr.rel (0) target = $region13
    $region12: #{tpu_custom_call.1} parent=1 // pred_region
      %45 = vsyncadd [#allocation7], 0
      %s46 = sshll.u32 %s2, 4
      %s47 = int_to_ptr.hbm [resolvable:$true] %s46
      %s48 = sshll.u32 [#allocation8], 4
      %s49 = int_to_ptr.vmem [resolvable:$true] %s48
      %54 = dma.hbm_to_vmem [thread:$0]  %s47, 512, %s49, [#allocation7], 128, 128, 8
    $region13: #{tpu_custom_call.1} parent=1 // pred_fallthru
      _
    // Predicated region
    $region14: #{tpu_custom_call.1} parent=1 // pred_check
      _
    $region15: #{tpu_custom_call.1} parent=1 // pred_check_branch
      %56 = sbr.rel (0) target = $region17
    $region16: #{tpu_custom_call.1} parent=1 // pred_region
      _
    $region17: #{tpu_custom_call.1} parent=1 // pred_fallthru
      _
    // Predicated region
    $region18: #{tpu_custom_call.1} parent=1 // pred_check
      _
    $region19: #{tpu_custom_call.1} parent=1 // pred_check_branch
      %58 = sbr.rel (0) target = $region21
    $region20: #{tpu_custom_call.1} parent=1 // pred_region
      _
    $region21: #{tpu_custom_call.1} parent=1 // pred_fallthru
      _
    // Predicated region
    $region22: #{tpu_custom_call.1} parent=1 // pred_check
      _
    $region23: #{tpu_custom_call.1} parent=1 // pred_check_branch
      %60 = sbr.rel (0) target = $region25
    $region24: #{tpu_custom_call.1} parent=1 // pred_region
      _
    $region25: #{tpu_custom_call.1} parent=1 // pred_fallthru
      _
    // Predicated region
    $region26: #{tpu_custom_call.1} parent=1 // pred_check
      _
    $region27: #{tpu_custom_call.1} parent=1 // pred_check_branch
      %62 = sbr.rel (0) target = $region29
    $region28: #{tpu_custom_call.1} parent=1 // pred_region
      %64 = dma.done [#allocation4], 2048
    $region29: #{tpu_custom_call.1} parent=1 // pred_fallthru
      _
    // Predicated region
    $region30: #{tpu_custom_call.1} parent=1 // pred_check
      _
    $region31: #{tpu_custom_call.1} parent=1 // pred_check_branch
      %66 = sbr.rel (0) target = $region33
    $region32: #{tpu_custom_call.1} parent=1 // pred_region
      %68 = dma.done [#allocation7], 128
    $region33: #{tpu_custom_call.1} parent=1 // pred_fallthru
      _
    // Predicated region
    $region34: #{tpu_custom_call.1} parent=1 // pred_check
      _
    $region35: #{tpu_custom_call.1} parent=1 // pred_check_branch
      %70 = sbr.rel (0) target = $region37
    $region36: #{tpu_custom_call.1} parent=1 // pred_region
      %72 = dma.done [#allocation7], 512
    $region37: #{tpu_custom_call.1} parent=1 // pred_fallthru
      _
    %v73 = vld [vmem:[#allocation3] sm:$0xff]
    %v74 = vld [vmem:[#allocation3 + $0x8] sm:$0xff]
    %v75 = vld [vmem:[#allocation3 + $0x10] sm:$0xff]
    %v76 = vld [vmem:[#allocation3 + $0x18] sm:$0xff]
    %v77 = vld [vmem:[#allocation3 + $0x20] sm:$0xff]
    %v78 = vld [vmem:[#allocation3 + $0x28] sm:$0xff]
    %v79 = vld [vmem:[#allocation3 + $0x30] sm:$0xff]
    %v80 = vld [vmem:[#allocation3 + $0x38] sm:$0xff]
    %v81 = vld [vmem:[#allocation3 + $0x40] sm:$0xff]
    %v82 = vld [vmem:[#allocation3 + $0x48] sm:$0xff]
    %v83 = vld [vmem:[#allocation3 + $0x50] sm:$0xff]
    %v84 = vld [vmem:[#allocation3 + $0x58] sm:$0xff]
    %v85 = vld [vmem:[#allocation3 + $0x60] sm:$0xff]
    %v86 = vld [vmem:[#allocation3 + $0x68] sm:$0xff]
    %v87 = vld [vmem:[#allocation3 + $0x70] sm:$0xff]
    %v88 = vld [vmem:[#allocation3 + $0x78] sm:$0xff]
    %v89 = vld [vmem:[#allocation8] sm:$0xff]
    %v90 = vld [vmem:[#allocation8 + $0x8] sm:$0xff]
    %v91 = vld [vmem:[#allocation8 + $0x10] sm:$0xff]
    %v92 = vld [vmem:[#allocation8 + $0x18] sm:$0xff]
    %v93 = vld [vmem:[%s3] sm:$0x1]
    %v95 = vperm.slane %v93, 0
    %vm97 = vcmask 261120
    %v99 = vsel %vm97, %v73, 0
    %v102 = vsel %vm97, %v74, 0
    %v105 = vsel %vm97, %v75, 0
    %v108 = vsel %vm97, %v76, 0
    %v111 = vsel %vm97, %v77, 0
    %v114 = vsel %vm97, %v78, 0
    %v117 = vsel %vm97, %v79, 0
    %v120 = vsel %vm97, %v80, 0
    %v123 = vsel %vm97, %v81, 0
    %v126 = vsel %vm97, %v82, 0
    %v129 = vsel %vm97, %v83, 0
    %v132 = vsel %vm97, %v84, 0
    %v135 = vsel %vm97, %v85, 0
    %v138 = vsel %vm97, %v86, 0
    %v141 = vsel %vm97, %v87, 0
    %v144 = vsel %vm97, %v88, 0
    %146 = vmatpush.msra.mxu0 0.0
    %147 = vmatpush.msra.mxu0 0.0
    %148 = vmatpush.msra.mxu0 0.0
    %149 = vmatpush.msra.mxu0 0.0
    %150 = vmatpush.msra.mxu0 0.0
    %151 = vmatpush.msra.mxu0 0.0
    %152 = vmatpush.msra.mxu0 0.0
    %153 = vmatpush.msra.mxu0 0.0
    %154 = vmatpush.msra.mxu0 0.0
    %155 = vmatpush.msra.mxu0 0.0
    %156 = vmatpush.msra.mxu0 0.0
    %157 = vmatpush.msra.mxu0 0.0
    %158 = vmatpush.msra.mxu0 %v92
    %159 = vmatpush.msra.mxu0 %v91
    %160 = vmatpush.msra.mxu0 %v90
    %161 = vmatpush.msra.mxu0 %v89
    %162 = vmatmul.f32.gmra.mxu0 %v99
    %v163 = vpop.f32.mrf.mxu0
    %v164 = vadd.f32 %v95, %v163
    %165 = vmatmul.f32.gmra.mxu0 %v102
    %v166 = vpop.f32.mrf.mxu0
    %v167 = vadd.f32 %v95, %v166
    %168 = vmatmul.f32.gmra.mxu0 %v105
    %v169 = vpop.f32.mrf.mxu0
    %v170 = vadd.f32 %v95, %v169
    %171 = vmatmul.f32.gmra.mxu0 %v108
    %v172 = vpop.f32.mrf.mxu0
    %v173 = vadd.f32 %v95, %v172
    %174 = vmatmul.f32.gmra.mxu0 %v111
    %v175 = vpop.f32.mrf.mxu0
    %v176 = vadd.f32 %v95, %v175
    %177 = vmatmul.f32.gmra.mxu0 %v114
    %v178 = vpop.f32.mrf.mxu0
    %v179 = vadd.f32 %v95, %v178
    %180 = vmatmul.f32.gmra.mxu0 %v117
    %v181 = vpop.f32.mrf.mxu0
    %v182 = vadd.f32 %v95, %v181
    %183 = vmatmul.f32.gmra.mxu0 %v120
    %v184 = vpop.f32.mrf.mxu0
    %v185 = vadd.f32 %v95, %v184
    %186 = vmatmul.f32.gmra.mxu0 %v123
    %v187 = vpop.f32.mrf.mxu0
    %v188 = vadd.f32 %v95, %v187
    %189 = vmatmul.f32.gmra.mxu0 %v126
    %v190 = vpop.f32.mrf.mxu0
    %v191 = vadd.f32 %v95, %v190
    %192 = vmatmul.f32.gmra.mxu0 %v129
    %v193 = vpop.f32.mrf.mxu0
    %v194 = vadd.f32 %v95, %v193
    %195 = vmatmul.f32.gmra.mxu0 %v132
    %v196 = vpop.f32.mrf.mxu0
    %v197 = vadd.f32 %v95, %v196
    %198 = vmatmul.f32.gmra.mxu0 %v135
    %v199 = vpop.f32.mrf.mxu0
    %v200 = vadd.f32 %v95, %v199
    %201 = vmatmul.f32.gmra.mxu0 %v138
    %v202 = vpop.f32.mrf.mxu0
    %v203 = vadd.f32 %v95, %v202
    %204 = vmatmul.f32.gmra.mxu0 %v141
    %v205 = vpop.f32.mrf.mxu0
    %v206 = vadd.f32 %v95, %v205
    %207 = vmatmul.f32.gmra.mxu0 %v144
    %v208 = vpop.f32.mrf.mxu0
    %v209 = vadd.f32 %v95, %v208
    %210 = vdwg.mxu0
    %v211 = vld [vmem:[#allocation6] sm:$0xff]
    %v213 = vrot.slane %v211, 1
    %v214 = vrot.slane %v211, 2
    %v215 = vrot.slane %v211, 3
    %v216 = vrot.slane %v211, 4
    %v217 = vrot.slane %v211, 5
    %v218 = vrot.slane %v211, 6
    %v219 = vrot.slane %v211, 7
    %v220 = vperm.slane %v211, 0
    %v221 = vperm.slane %v213, 0
    %v222 = vperm.slane %v214, 0
    %v223 = vperm.slane %v215, 0
    %v224 = vperm.slane %v216, 0
    %v225 = vperm.slane %v217, 0
    %v226 = vperm.slane %v218, 0
    %v227 = vperm.slane %v219, 0
    %v236 = vadd.f32 %v164, %v220
    %v237 = vadd.f32 %v167, %v220
    %v238 = vadd.f32 %v170, %v221
    %v239 = vadd.f32 %v173, %v221
    %v240 = vadd.f32 %v176, %v222
    %v241 = vadd.f32 %v179, %v222
    %v242 = vadd.f32 %v182, %v223
    %v243 = vadd.f32 %v185, %v223
    %v244 = vadd.f32 %v188, %v224
    %v245 = vadd.f32 %v191, %v224
    %v246 = vadd.f32 %v194, %v225
    %v247 = vadd.f32 %v197, %v225
    %v248 = vadd.f32 %v200, %v226
    %v249 = vadd.f32 %v203, %v226
    %v250 = vadd.f32 %v206, %v227
    %v251 = vadd.f32 %v209, %v227
    %v252 = vmax.f32 %v236, 0.0
    %v253 = vmax.f32 %v237, 0.0
    %v254 = vmax.f32 %v238, 0.0
    %v255 = vmax.f32 %v239, 0.0
    %v256 = vmax.f32 %v240, 0.0
    %v257 = vmax.f32 %v241, 0.0
    %v258 = vmax.f32 %v242, 0.0
    %v259 = vmax.f32 %v243, 0.0
    %v260 = vmax.f32 %v244, 0.0
    %v261 = vmax.f32 %v245, 0.0
    %v262 = vmax.f32 %v246, 0.0
    %v263 = vmax.f32 %v247, 0.0
    %v264 = vmax.f32 %v248, 0.0
    %v265 = vmax.f32 %v249, 0.0
    %v266 = vmax.f32 %v250, 0.0
    %v267 = vmax.f32 %v251, 0.0
    %v268 = vld [vmem:[%s4] sm:$0x1]
    %v270 = vperm.slane %v268, 0
    %v272 = vmul.f32 %v252, %v270
    %v273 = vmul.f32 %v253, %v270
    %v274 = vmul.f32 %v254, %v270
    %v275 = vmul.f32 %v255, %v270
    %v276 = vmul.f32 %v256, %v270
    %v277 = vmul.f32 %v257, %v270
    %v278 = vmul.f32 %v258, %v270
    %v279 = vmul.f32 %v259, %v270
    %v280 = vmul.f32 %v260, %v270
    %v281 = vmul.f32 %v261, %v270
    %v282 = vmul.f32 %v262, %v270
    %v283 = vmul.f32 %v263, %v270
    %v284 = vmul.f32 %v264, %v270
    %v285 = vmul.f32 %v265, %v270
    %v286 = vmul.f32 %v266, %v270
    %v287 = vmul.f32 %v267, %v270
    %v288 = vsel %vm97, %v272, 0.0
    %289 = vadd.xlane.f32.xlu0 %v288
    %v290 = vpop.xlane.xlu0 %289
    %v291 = vsel %vm97, %v273, 0.0
    %292 = vadd.xlane.f32.xlu0 %v291
    %v293 = vpop.xlane.xlu0 %292
    %v294 = vsel %vm97, %v274, 0.0
    %295 = vadd.xlane.f32.xlu0 %v294
    %v296 = vpop.xlane.xlu0 %295
    %v297 = vsel %vm97, %v275, 0.0
    %298 = vadd.xlane.f32.xlu0 %v297
    %v299 = vpop.xlane.xlu0 %298
    %v300 = vsel %vm97, %v276, 0.0
    %301 = vadd.xlane.f32.xlu0 %v300
    %v302 = vpop.xlane.xlu0 %301
    %v303 = vsel %vm97, %v277, 0.0
    %304 = vadd.xlane.f32.xlu0 %v303
    %v305 = vpop.xlane.xlu0 %304
    %v306 = vsel %vm97, %v278, 0.0
    %307 = vadd.xlane.f32.xlu0 %v306
    %v308 = vpop.xlane.xlu0 %307
    %v309 = vsel %vm97, %v279, 0.0
    %310 = vadd.xlane.f32.xlu0 %v309
    %v311 = vpop.xlane.xlu0 %310
    %v312 = vsel %vm97, %v280, 0.0
    %313 = vadd.xlane.f32.xlu0 %v312
    %v314 = vpop.xlane.xlu0 %313
    %v315 = vsel %vm97, %v281, 0.0
    %316 = vadd.xlane.f32.xlu0 %v315
    %v317 = vpop.xlane.xlu0 %316
    %v318 = vsel %vm97, %v282, 0.0
    %319 = vadd.xlane.f32.xlu0 %v318
    %v320 = vpop.xlane.xlu0 %319
    %v321 = vsel %vm97, %v283, 0.0
    %322 = vadd.xlane.f32.xlu0 %v321
    %v323 = vpop.xlane.xlu0 %322
    %v324 = vsel %vm97, %v284, 0.0
    %325 = vadd.xlane.f32.xlu0 %v324
    %v326 = vpop.xlane.xlu0 %325
    %v327 = vsel %vm97, %v285, 0.0
    %328 = vadd.xlane.f32.xlu0 %v327
    %v329 = vpop.xlane.xlu0 %328
    %v330 = vsel %vm97, %v286, 0.0
    %331 = vadd.xlane.f32.xlu0 %v330
    %v332 = vpop.xlane.xlu0 %331
    %v333 = vsel %vm97, %v287, 0.0
    %334 = vadd.xlane.f32.xlu0 %v333
    %v335 = vpop.xlane.xlu0 %334
    %s336 = sld [smem:[#allocation2]]
    %v337 = vstv %s336
    %v338 = vadd.f32 %v290, %v337
    %v339 = vadd.f32 %v293, %v337
    %v340 = vadd.f32 %v296, %v337
    %v341 = vadd.f32 %v299, %v337
    %v342 = vadd.f32 %v302, %v337
    %v343 = vadd.f32 %v305, %v337
    %v344 = vadd.f32 %v308, %v337
    %v345 = vadd.f32 %v311, %v337
    %v346 = vadd.f32 %v314, %v337
    %v347 = vadd.f32 %v317, %v337
    %v348 = vadd.f32 %v320, %v337
    %v349 = vadd.f32 %v323, %v337
    %v350 = vadd.f32 %v326, %v337
    %v351 = vadd.f32 %v329, %v337
    %v352 = vadd.f32 %v332, %v337
    %v353 = vadd.f32 %v335, %v337
    %v370 = vlaneseq
    %v371 = vand.u32 %v370, 127
    %v372 = vperm.slane %v338, %v371
    %v373 = vadd.s32 %v371, 4294967288
    %v374 = vperm.slane %v339, %v373
    %vm375 = vcmask 130112
    %v376 = vsel %vm375, %v374, %v372
    %v377 = vperm.slane %v340, %v371
    %v378 = vperm.slane %v341, %v373
    %v379 = vsel %vm375, %v378, %v377
    %v380 = vperm.slane %v342, %v371
    %v381 = vperm.slane %v343, %v373
    %v382 = vsel %vm375, %v381, %v380
    %v383 = vperm.slane %v344, %v371
    %v384 = vperm.slane %v345, %v373
    %v385 = vsel %vm375, %v384, %v383
    %v386 = vperm.slane %v346, %v371
    %v387 = vperm.slane %v347, %v373
    %v388 = vsel %vm375, %v387, %v386
    %v389 = vperm.slane %v348, %v371
    %v390 = vperm.slane %v349, %v373
    %v391 = vsel %vm375, %v390, %v389
    %v392 = vperm.slane %v350, %v371
    %v393 = vperm.slane %v351, %v373
    %v394 = vsel %vm375, %v393, %v392
    %v395 = vperm.slane %v352, %v371
    %v396 = vperm.slane %v353, %v373
    %v397 = vsel %vm375, %v396, %v395
    %vm398 = vcmask 1041409
    %v399 = vsel %vm398, %v379, %v376
    %vm400 = vcmask 1042434
    %v401 = vsel %vm400, %v382, %v399
    %vm402 = vcmask 1043459
    %v403 = vsel %vm402, %v385, %v401
    %vm404 = vcmask 1044484
    %v405 = vsel %vm404, %v388, %v403
    %vm406 = vcmask 1045509
    %v407 = vsel %vm406, %v391, %v405
    %vm408 = vcmask 1046534
    %v409 = vsel %vm408, %v394, %v407
    %vm410 = vcmask 1047559
    %v411 = vsel %vm410, %v397, %v409
    %vm413 = vcmask 130048
    %v414 = vsel %vm413, %v411, -inf
    %415 = vmax.xlane.f32.xlu0 %v414
    %v416 = vpop.xlane.xlu0 %415
    %v418 = vperm.slane %v416, 0
    %v419 = vperm.slane %v416, 1
    %v420 = vperm.slane %v416, 2
    %v421 = vperm.slane %v416, 3
    %v422 = vperm.slane %v416, 4
    %v423 = vperm.slane %v416, 5
    %v424 = vperm.slane %v416, 6
    %v425 = vperm.slane %v416, 7
    %v434 = vsub.f32 %v338, %v418
    %v435 = vsub.f32 %v339, %v418
    %v436 = vsub.f32 %v340, %v419
    %v437 = vsub.f32 %v341, %v419
    %v438 = vsub.f32 %v342, %v420
    %v439 = vsub.f32 %v343, %v420
    %v440 = vsub.f32 %v344, %v421
    %v441 = vsub.f32 %v345, %v421
    %v442 = vsub.f32 %v346, %v422
    %v443 = vsub.f32 %v347, %v422
    %v444 = vsub.f32 %v348, %v423
    %v445 = vsub.f32 %v349, %v423
    %v446 = vsub.f32 %v350, %v424
    %v447 = vsub.f32 %v351, %v424
    %v448 = vsub.f32 %v352, %v425
    %v449 = vsub.f32 %v353, %v425
    %v450 = vmul.f32 %v434, 1.442695
    %v451 = vpow.pop %v450
    %v452 = vmul.f32 %v435, 1.442695
    %v453 = vpow.pop %v452
    %v454 = vmul.f32 %v436, 1.442695
    %v455 = vpow.pop %v454
    %v456 = vmul.f32 %v437, 1.442695
    %v457 = vpow.pop %v456
    %v458 = vmul.f32 %v438, 1.442695
    %v459 = vpow.pop %v458
    %v460 = vmul.f32 %v439, 1.442695
    %v461 = vpow.pop %v460
    %v462 = vmul.f32 %v440, 1.442695
    %v463 = vpow.pop %v462
    %v464 = vmul.f32 %v441, 1.442695
    %v465 = vpow.pop %v464
    %v466 = vmul.f32 %v442, 1.442695
    %v467 = vpow.pop %v466
    %v468 = vmul.f32 %v443, 1.442695
    %v469 = vpow.pop %v468
    %v470 = vmul.f32 %v444, 1.442695
    %v471 = vpow.pop %v470
    %v472 = vmul.f32 %v445, 1.442695
    %v473 = vpow.pop %v472
    %v474 = vmul.f32 %v446, 1.442695
    %v475 = vpow.pop %v474
    %v476 = vmul.f32 %v447, 1.442695
    %v477 = vpow.pop %v476
    %v478 = vmul.f32 %v448, 1.442695
    %v479 = vpow.pop %v478
    %v480 = vmul.f32 %v449, 1.442695
    %v481 = vpow.pop %v480
    %498 = vset.pattern.permute.xlu0 0
    %499 = vperm.xlu0 %498, %v451
    %v500 = vpop.permute.xlu0 %499
    %501 = vset.pattern.permute.xlu0 0
    %502 = vperm.xlu0 %501, %v453
    %v503 = vpop.permute.xlu0 %502
    %504 = vset.pattern.permute.xlu0 0
    %505 = vperm.xlu0 %504, %v455
    %v506 = vpop.permute.xlu0 %505
    %507 = vset.pattern.permute.xlu0 0
    %508 = vperm.xlu0 %507, %v457
    %v509 = vpop.permute.xlu0 %508
    %510 = vset.pattern.permute.xlu0 0
    %511 = vperm.xlu0 %510, %v459
    %v512 = vpop.permute.xlu0 %511
    %513 = vset.pattern.permute.xlu0 0
    %514 = vperm.xlu0 %513, %v461
    %v515 = vpop.permute.xlu0 %514
    %516 = vset.pattern.permute.xlu0 0
    %517 = vperm.xlu0 %516, %v463
    %v518 = vpop.permute.xlu0 %517
    %519 = vset.pattern.permute.xlu0 0
    %520 = vperm.xlu0 %519, %v465
    %v521 = vpop.permute.xlu0 %520
    %522 = vset.pattern.permute.xlu0 0
    %523 = vperm.xlu0 %522, %v467
    %v524 = vpop.permute.xlu0 %523
    %525 = vset.pattern.permute.xlu0 0
    %526 = vperm.xlu0 %525, %v469
    %v527 = vpop.permute.xlu0 %526
    %528 = vset.pattern.permute.xlu0 0
    %529 = vperm.xlu0 %528, %v471
    %v530 = vpop.permute.xlu0 %529
    %531 = vset.pattern.permute.xlu0 0
    %532 = vperm.xlu0 %531, %v473
    %v533 = vpop.permute.xlu0 %532
    %534 = vset.pattern.permute.xlu0 0
    %535 = vperm.xlu0 %534, %v475
    %v536 = vpop.permute.xlu0 %535
    %537 = vset.pattern.permute.xlu0 0
    %538 = vperm.xlu0 %537, %v477
    %v539 = vpop.permute.xlu0 %538
    %540 = vset.pattern.permute.xlu0 0
    %541 = vperm.xlu0 %540, %v479
    %v542 = vpop.permute.xlu0 %541
    %543 = vset.pattern.permute.xlu0 0
    %544 = vperm.xlu0 %543, %v481
    %v545 = vpop.permute.xlu0 %544
    %v546 = vperm.slane %v500, %v371
    %v547 = vperm.slane %v503, %v373
    %v548 = vsel %vm375, %v547, %v546
    %v549 = vperm.slane %v506, %v371
    %v550 = vperm.slane %v509, %v373
    %v551 = vsel %vm375, %v550, %v549
    %v552 = vperm.slane %v512, %v371
    %v553 = vperm.slane %v515, %v373
    %v554 = vsel %vm375, %v553, %v552
    %v555 = vperm.slane %v518, %v371
    %v556 = vperm.slane %v521, %v373
    %v557 = vsel %vm375, %v556, %v555
    %v558 = vperm.slane %v524, %v371
    %v559 = vperm.slane %v527, %v373
    %v560 = vsel %vm375, %v559, %v558
    %v561 = vperm.slane %v530, %v371
    %v562 = vperm.slane %v533, %v373
    %v563 = vsel %vm375, %v562, %v561
    %v564 = vperm.slane %v536, %v371
    %v565 = vperm.slane %v539, %v373
    %v566 = vsel %vm375, %v565, %v564
    %v567 = vperm.slane %v542, %v371
    %v568 = vperm.slane %v545, %v373
    %v569 = vsel %vm375, %v568, %v567
    %v570 = vsel %vm398, %v551, %v548
    %v571 = vsel %vm400, %v554, %v570
    %v572 = vsel %vm402, %v557, %v571
    %v573 = vsel %vm404, %v560, %v572
    %v574 = vsel %vm406, %v563, %v573
    %v575 = vsel %vm408, %v566, %v574
    %v576 = vsel %vm410, %v569, %v575
    %v578 = vsel %vm413, %v576, 0.0
    %579 = vadd.xlane.f32.xlu0 %v578
    %v580 = vpop.xlane.xlu0 %579
    %v581 = vrcp.pop %v580
    %v582 = vmul.f32 %v580, %v581
    %v583 = vsub.f32 1.0, %v582
    %v584 = vmul.f32 %v581, %v583
    %v585 = vadd.f32 %v581, %v584
    %vm586 = vweird.f32 %v580
    %vm587 = vweird.f32 %v581
    %vm588 = vmor %vm586, %vm587
    %v589 = vsel %vm588, %v581, %v585
    %v590 = vand.u32 2147483647, %v580
    %vm591 = vcmp.eq.f32.partialorder %v590, 8.507059e+37
    %v592 = vand.u32 %v580, 2147483648
    %v593 = vor.u32 1.1754944e-38, %v592
    %v594 = vsel %vm591, %v593, %v589
    %v596 = vperm.slane %v594, 0
    %v597 = vperm.slane %v594, 1
    %v598 = vperm.slane %v594, 2
    %v599 = vperm.slane %v594, 3
    %v600 = vperm.slane %v594, 4
    %v601 = vperm.slane %v594, 5
    %v602 = vperm.slane %v594, 6
    %v603 = vperm.slane %v594, 7
    %v612 = vmul.f32 %v451, %v596
    %v613 = vmul.f32 %v453, %v596
    %v614 = vmul.f32 %v455, %v597
    %v615 = vmul.f32 %v457, %v597
    %v616 = vmul.f32 %v459, %v598
    %v617 = vmul.f32 %v461, %v598
    %v618 = vmul.f32 %v463, %v599
    %v619 = vmul.f32 %v465, %v599
    %v620 = vmul.f32 %v467, %v600
    %v621 = vmul.f32 %v469, %v600
    %v622 = vmul.f32 %v471, %v601
    %v623 = vmul.f32 %v473, %v601
    %v624 = vmul.f32 %v475, %v602
    %v625 = vmul.f32 %v477, %v602
    %v626 = vmul.f32 %v479, %v603
    %v627 = vmul.f32 %v481, %v603
    %630 = vset.pattern.permute.xlu0 0
    %631 = vperm.xlu0 %630, %v612
    %v632 = vpop.permute.xlu0 %631
    %633 = vset.pattern.permute.xlu0 0
    %634 = vperm.xlu0 %633, %v613
    %v635 = vpop.permute.xlu0 %634
    %v636 = vperm.slane %v632, %v371
    %v637 = vperm.slane %v635, %v373
    %v638 = vsel %vm375, %v637, %v636
    %v639 = vsel %vm413, %v638, 0
    %641 = vmatpush.msra.mxu0 0.0
    %642 = vmatpush.msra.mxu0 0.0
    %643 = vmatpush.msra.mxu0 0.0
    %644 = vmatpush.msra.mxu0 0.0
    %645 = vmatpush.msra.mxu0 0.0
    %646 = vmatpush.msra.mxu0 0.0
    %647 = vmatpush.msra.mxu0 0.0
    %648 = vmatpush.msra.mxu0 0.0
    %649 = vmatpush.msra.mxu0 0.0
    %650 = vmatpush.msra.mxu0 0.0
    %651 = vmatpush.msra.mxu0 0.0
    %652 = vmatpush.msra.mxu0 0.0
    %653 = vmatpush.msra.mxu0 0.0
    %654 = vmatpush.msra.mxu0 0.0
    %655 = vmatpush.msra.mxu0 %v74
    %656 = vmatpush.msra.mxu0 %v73
    %657 = vmatmul.f32.gmra.mxu0 %v639
    %v658 = vpop.f32.mrf.mxu0
    %v659 = vadd.f32 0.0, %v658
    %660 = vdwg.mxu0
    %663 = vset.pattern.permute.xlu0 0
    %664 = vperm.xlu0 %663, %v614
    %v665 = vpop.permute.xlu0 %664
    %666 = vset.pattern.permute.xlu0 0
    %667 = vperm.xlu0 %666, %v615
    %v668 = vpop.permute.xlu0 %667
    %v669 = vperm.slane %v665, %v371
    %v670 = vperm.slane %v668, %v373
    %v671 = vsel %vm375, %v670, %v669
    %v672 = vsel %vm413, %v671, 0
    %674 = vmatpush.msra.mxu0 0.0
    %675 = vmatpush.msra.mxu0 0.0
    %676 = vmatpush.msra.mxu0 0.0
    %677 = vmatpush.msra.mxu0 0.0
    %678 = vmatpush.msra.mxu0 0.0
    %679 = vmatpush.msra.mxu0 0.0
    %680 = vmatpush.msra.mxu0 0.0
    %681 = vmatpush.msra.mxu0 0.0
    %682 = vmatpush.msra.mxu0 0.0
    %683 = vmatpush.msra.mxu0 0.0
    %684 = vmatpush.msra.mxu0 0.0
    %685 = vmatpush.msra.mxu0 0.0
    %686 = vmatpush.msra.mxu0 0.0
    %687 = vmatpush.msra.mxu0 0.0
    %688 = vmatpush.msra.mxu0 %v76
    %689 = vmatpush.msra.mxu0 %v75
    %690 = vmatmul.f32.gmra.mxu0 %v672
    %v691 = vpop.f32.mrf.mxu0
    %v692 = vadd.f32 0.0, %v691
    %693 = vdwg.mxu0
    %696 = vset.pattern.permute.xlu0 0
    %697 = vperm.xlu0 %696, %v616
    %v698 = vpop.permute.xlu0 %697
    %699 = vset.pattern.permute.xlu0 0
    %700 = vperm.xlu0 %699, %v617
    %v701 = vpop.permute.xlu0 %700
    %v702 = vperm.slane %v698, %v371
    %v703 = vperm.slane %v701, %v373
    %v704 = vsel %vm375, %v703, %v702
    %v705 = vsel %vm413, %v704, 0
    %707 = vmatpush.msra.mxu0 0.0
    %708 = vmatpush.msra.mxu0 0.0
    %709 = vmatpush.msra.mxu0 0.0
    %710 = vmatpush.msra.mxu0 0.0
    %711 = vmatpush.msra.mxu0 0.0
    %712 = vmatpush.msra.mxu0 0.0
    %713 = vmatpush.msra.mxu0 0.0
    %714 = vmatpush.msra.mxu0 0.0
    %715 = vmatpush.msra.mxu0 0.0
    %716 = vmatpush.msra.mxu0 0.0
    %717 = vmatpush.msra.mxu0 0.0
    %718 = vmatpush.msra.mxu0 0.0
    %719 = vmatpush.msra.mxu0 0.0
    %720 = vmatpush.msra.mxu0 0.0
    %721 = vmatpush.msra.mxu0 %v78
    %722 = vmatpush.msra.mxu0 %v77
    %723 = vmatmul.f32.gmra.mxu0 %v705
    %v724 = vpop.f32.mrf.mxu0
    %v725 = vadd.f32 0.0, %v724
    %726 = vdwg.mxu0
    %729 = vset.pattern.permute.xlu0 0
    %730 = vperm.xlu0 %729, %v618
    %v731 = vpop.permute.xlu0 %730
    %732 = vset.pattern.permute.xlu0 0
    %733 = vperm.xlu0 %732, %v619
    %v734 = vpop.permute.xlu0 %733
    %v735 = vperm.slane %v731, %v371
    %v736 = vperm.slane %v734, %v373
    %v737 = vsel %vm375, %v736, %v735
    %v738 = vsel %vm413, %v737, 0
    %740 = vmatpush.msra.mxu0 0.0
    %741 = vmatpush.msra.mxu0 0.0
    %742 = vmatpush.msra.mxu0 0.0
    %743 = vmatpush.msra.mxu0 0.0
    %744 = vmatpush.msra.mxu0 0.0
    %745 = vmatpush.msra.mxu0 0.0
    %746 = vmatpush.msra.mxu0 0.0
    %747 = vmatpush.msra.mxu0 0.0
    %748 = vmatpush.msra.mxu0 0.0
    %749 = vmatpush.msra.mxu0 0.0
    %750 = vmatpush.msra.mxu0 0.0
    %751 = vmatpush.msra.mxu0 0.0
    %752 = vmatpush.msra.mxu0 0.0
    %753 = vmatpush.msra.mxu0 0.0
    %754 = vmatpush.msra.mxu0 %v80
    %755 = vmatpush.msra.mxu0 %v79
    %756 = vmatmul.f32.gmra.mxu0 %v738
    %v757 = vpop.f32.mrf.mxu0
    %v758 = vadd.f32 0.0, %v757
    %759 = vdwg.mxu0
    %762 = vset.pattern.permute.xlu0 0
    %763 = vperm.xlu0 %762, %v620
    %v764 = vpop.permute.xlu0 %763
    %765 = vset.pattern.permute.xlu0 0
    %766 = vperm.xlu0 %765, %v621
    %v767 = vpop.permute.xlu0 %766
    %v768 = vperm.slane %v764, %v371
    %v769 = vperm.slane %v767, %v373
    %v770 = vsel %vm375, %v769, %v768
    %v771 = vsel %vm413, %v770, 0
    %773 = vmatpush.msra.mxu0 0.0
    %774 = vmatpush.msra.mxu0 0.0
    %775 = vmatpush.msra.mxu0 0.0
    %776 = vmatpush.msra.mxu0 0.0
    %777 = vmatpush.msra.mxu0 0.0
    %778 = vmatpush.msra.mxu0 0.0
    %779 = vmatpush.msra.mxu0 0.0
    %780 = vmatpush.msra.mxu0 0.0
    %781 = vmatpush.msra.mxu0 0.0
    %782 = vmatpush.msra.mxu0 0.0
    %783 = vmatpush.msra.mxu0 0.0
    %784 = vmatpush.msra.mxu0 0.0
    %785 = vmatpush.msra.mxu0 0.0
    %786 = vmatpush.msra.mxu0 0.0
    %787 = vmatpush.msra.mxu0 %v82
    %788 = vmatpush.msra.mxu0 %v81
    %789 = vmatmul.f32.gmra.mxu0 %v771
    %v790 = vpop.f32.mrf.mxu0
    %v791 = vadd.f32 0.0, %v790
    %792 = vdwg.mxu0
    %795 = vset.pattern.permute.xlu0 0
    %796 = vperm.xlu0 %795, %v622
    %v797 = vpop.permute.xlu0 %796
    %798 = vset.pattern.permute.xlu0 0
    %799 = vperm.xlu0 %798, %v623
    %v800 = vpop.permute.xlu0 %799
    %v801 = vperm.slane %v797, %v371
    %v802 = vperm.slane %v800, %v373
    %v803 = vsel %vm375, %v802, %v801
    %v804 = vsel %vm413, %v803, 0
    %806 = vmatpush.msra.mxu0 0.0
    %807 = vmatpush.msra.mxu0 0.0
    %808 = vmatpush.msra.mxu0 0.0
    %809 = vmatpush.msra.mxu0 0.0
    %810 = vmatpush.msra.mxu0 0.0
    %811 = vmatpush.msra.mxu0 0.0
    %812 = vmatpush.msra.mxu0 0.0
    %813 = vmatpush.msra.mxu0 0.0
    %814 = vmatpush.msra.mxu0 0.0
    %815 = vmatpush.msra.mxu0 0.0
    %816 = vmatpush.msra.mxu0 0.0
    %817 = vmatpush.msra.mxu0 0.0
    %818 = vmatpush.msra.mxu0 0.0
    %819 = vmatpush.msra.mxu0 0.0
    %820 = vmatpush.msra.mxu0 %v84
    %821 = vmatpush.msra.mxu0 %v83
    %822 = vmatmul.f32.gmra.mxu0 %v804
    %v823 = vpop.f32.mrf.mxu0
    %v824 = vadd.f32 0.0, %v823
    %825 = vdwg.mxu0
    %828 = vset.pattern.permute.xlu0 0
    %829 = vperm.xlu0 %828, %v624
    %v830 = vpop.permute.xlu0 %829
    %831 = vset.pattern.permute.xlu0 0
    %832 = vperm.xlu0 %831, %v625
    %v833 = vpop.permute.xlu0 %832
    %v834 = vperm.slane %v830, %v371
    %v835 = vperm.slane %v833, %v373
    %v836 = vsel %vm375, %v835, %v834
    %v837 = vsel %vm413, %v836, 0
    %839 = vmatpush.msra.mxu0 0.0
    %840 = vmatpush.msra.mxu0 0.0
    %841 = vmatpush.msra.mxu0 0.0
    %842 = vmatpush.msra.mxu0 0.0
    %843 = vmatpush.msra.mxu0 0.0
    %844 = vmatpush.msra.mxu0 0.0
    %845 = vmatpush.msra.mxu0 0.0
    %846 = vmatpush.msra.mxu0 0.0
    %847 = vmatpush.msra.mxu0 0.0
    %848 = vmatpush.msra.mxu0 0.0
    %849 = vmatpush.msra.mxu0 0.0
    %850 = vmatpush.msra.mxu0 0.0
    %851 = vmatpush.msra.mxu0 0.0
    %852 = vmatpush.msra.mxu0 0.0
    %853 = vmatpush.msra.mxu0 %v86
    %854 = vmatpush.msra.mxu0 %v85
    %855 = vmatmul.f32.gmra.mxu0 %v837
    %v856 = vpop.f32.mrf.mxu0
    %v857 = vadd.f32 0.0, %v856
    %858 = vdwg.mxu0
    %861 = vset.pattern.permute.xlu0 0
    %862 = vperm.xlu0 %861, %v626
    %v863 = vpop.permute.xlu0 %862
    %864 = vset.pattern.permute.xlu0 0
    %865 = vperm.xlu0 %864, %v627
    %v866 = vpop.permute.xlu0 %865
    %v867 = vperm.slane %v863, %v371
    %v868 = vperm.slane %v866, %v373
    %v869 = vsel %vm375, %v868, %v867
    %v870 = vsel %vm413, %v869, 0
    %872 = vmatpush.msra.mxu0 0.0
    %873 = vmatpush.msra.mxu0 0.0
    %874 = vmatpush.msra.mxu0 0.0
    %875 = vmatpush.msra.mxu0 0.0
    %876 = vmatpush.msra.mxu0 0.0
    %877 = vmatpush.msra.mxu0 0.0
    %878 = vmatpush.msra.mxu0 0.0
    %879 = vmatpush.msra.mxu0 0.0
    %880 = vmatpush.msra.mxu0 0.0
    %881 = vmatpush.msra.mxu0 0.0
    %882 = vmatpush.msra.mxu0 0.0
    %883 = vmatpush.msra.mxu0 0.0
    %884 = vmatpush.msra.mxu0 0.0
    %885 = vmatpush.msra.mxu0 0.0
    %886 = vmatpush.msra.mxu0 %v88
    %887 = vmatpush.msra.mxu0 %v87
    %888 = vmatmul.f32.gmra.mxu0 %v870
    %v889 = vpop.f32.mrf.mxu0
    %v890 = vadd.f32 0.0, %v889
    %891 = vdwg.mxu0
    %v900 = vrot.slane %v692, 7
    %v901 = vsel %vm398, %v900, %v659
    %v902 = vrot.slane %v725, 6
    %v903 = vsel %vm400, %v902, %v901
    %v904 = vrot.slane %v758, 5
    %v905 = vsel %vm402, %v904, %v903
    %v906 = vrot.slane %v791, 4
    %v907 = vsel %vm404, %v906, %v905
    %v908 = vrot.slane %v824, 3
    %v909 = vsel %vm406, %v908, %v907
    %v910 = vrot.slane %v857, 2
    %v911 = vsel %vm408, %v910, %v909
    %v912 = vrot.slane %v890, 1
    %v913 = vsel %vm410, %v912, %v911
    %v915 = vsel %vm97, %v913, 0.0
    %v916 = vsel %vm398, %v671, %v638
    %v917 = vsel %vm400, %v704, %v916
    %v918 = vsel %vm402, %v737, %v917
    %v919 = vsel %vm404, %v770, %v918
    %v920 = vsel %vm406, %v803, %v919
    %v921 = vsel %vm408, %v836, %v920
    %v922 = vsel %vm410, %v869, %v921
    %v924 = vsel %vm413, %v922, 0.0
    %925 = vst [vmem:[#allocation9] sm:$0xff] %v915
    %926 = vst [vmem:[#allocation10] sm:$0xff] %v924
    // Predicated region
    $region38: #{tpu_custom_call.1} parent=1 // pred_check
      _
    $region39: #{tpu_custom_call.1} parent=1 // pred_check_branch
      %928 = sbr.rel (0) target = $region41
    $region40: #{tpu_custom_call.1} parent=1 // pred_region
      %930 = vsyncadd [#allocation5], 0
      %s932 = sshll.u32 [#allocation9], 4
      %s933 = int_to_ptr.vmem [resolvable:$true] %s932
      %s934 = sshll.u32 %s6, 4
      %s935 = int_to_ptr.hbm [resolvable:$true] %s934
      %937 = dma.vmem_to_hbm [thread:$0]  %s933, 128, %s935, [#allocation5]
    $region41: #{tpu_custom_call.1} parent=1 // pred_fallthru
      _
    // Predicated region
    $region42: #{tpu_custom_call.1} parent=1 // pred_check
      _
    $region43: #{tpu_custom_call.1} parent=1 // pred_check_branch
      %939 = sbr.rel (0) target = $region45
    $region44: #{tpu_custom_call.1} parent=1 // pred_region
      %941 = vsyncadd [#allocation11], 0
      %s943 = sshll.u32 [#allocation10], 4
      %s944 = int_to_ptr.vmem [resolvable:$true] %s943
      %s945 = sshll.u32 %s7, 4
      %s946 = int_to_ptr.hbm [resolvable:$true] %s945
      %948 = dma.vmem_to_hbm [thread:$0]  %s944, 128, %s946, [#allocation11]
    $region45: #{tpu_custom_call.1} parent=1 // pred_fallthru
      _
    // Predicated region
    $region46: #{tpu_custom_call.1} parent=1 // pred_check
      _
    $region47: #{tpu_custom_call.1} parent=1 // pred_check_branch
      %950 = sbr.rel (0) target = $region49
    $region48: #{tpu_custom_call.1} parent=1 // pred_region
      %952 = dma.done [#allocation5], 128
    $region49: #{tpu_custom_call.1} parent=1 // pred_fallthru
      _
    // Predicated region
    $region50: #{tpu_custom_call.1} parent=1 // pred_check
      _
    $region51: #{tpu_custom_call.1} parent=1 // pred_check_branch
      %954 = sbr.rel (0) target = $region53
    $region52: #{tpu_custom_call.1} parent=1 // pred_region
      %956 = dma.done [#allocation11], 128
    $region53: #{tpu_custom_call.1} parent=1 // pred_fallthru
      _
    %957 = vsyncpa [#allocation4], 1
    %958 = vsyncpa [#allocation7], 1
    %959 = vsyncpa [#allocation5], 1
    %960 = vsyncpa [#allocation11], 1

</llo_original>
